<compile_context>
chip_gen: v7x
topology: tpu7x:2x2x1
jax: 0.10.0
libtpu: 0.0.40
codegen_flags: <defaults>
</compile_context>

<pallas_src>
import jax
import jax.numpy as jnp
from jax.experimental import pallas as pl
from jax.experimental.pallas import tpu as pltpu

# Dilation rates actually used by MRF.forward (rate[3] == 8 is unused in PyTorch).
RATES = (1, 2, 4)


# ----------------------------------------------------------------------------
# Fused Pallas kernel
# ----------------------------------------------------------------------------
def _make_mrf_kernel(H, W, inner, inner_p, rates):
    HW = H * W
    d_max = max(rates)
    assert d_max < W and d_max < H, "dilation must be smaller than the feature map"
    # Roll-wrap safety: every lane wrapped by the largest flat shift is a position the
    # valid_h/valid_w masks already zero out (requires d_max*W + d_max < H*W).
    assert d_max * W + d_max < HW
    pow2_w = (W & (W - 1)) == 0
    n_br = len(rates)

    def kernel(x_ref, w1_ref, w3_ref, wp_ref, bias_ref, o_ref):
        # x_ref:    (1, Cin, HW)                 bf16, lane-dense activations
        # w1_ref:   (n_br*inner_p, Cin)          bf16, stacked branch 1x1 (BN folded, rows padded)
        # w3_ref:   (n_br*inner, 9*n_br*inner_p) bf16, block-diagonal dilated 3x3 (taps on K)
        # wp_ref:   (Cout, n_br*inner)           bf16, projection 1x1 (BN folded)
        # bias_ref: (n_br*inner_p + n_br*inner + Cout, 1)  f32, merged biases
        bias = bias_ref[...]
        b1 = bias[:n_br * inner_p]
        b3 = bias[n_br * inner_p:n_br * (inner_p + inner)]
        bp = bias[n_br * (inner_p + inner):]

        x = x_ref[0]                                               # (Cin, HW) bf16

        # --- all branch 1x1 convs (+folded BN) + ReLU as ONE matmul ---
        y1 = jnp.dot(w1_ref[...], x, preferred_element_type=jnp.float32)
        y1 = jnp.maximum(y1 + b1, 0.0)                             # (n_br*inner_p, HW) f32

        # --- zero-padding masks, hoisted & dedup'd per unique dy / dx ---
        col = jax.lax.broadcasted_iota(jnp.int32, (1, HW), 1)
        w_idx = (col & (W - 1)) if pow2_w else (col % W)
        offs = sorted({(k - 1) * d for d in rates for k in range(3)})
        hmask = {dy: (col >= max(0, -dy) * W) & (col < min(H, H - dy) * W)
                 for dy in offs}
        wmask = {dx: (w_idx + dx >= 0) & (w_idx + dx < W) for dx in offs}
        mask = {}
        for d in rates:
            for ky in range(3):
                for kx in range(3):
                    dy, dx = (ky - 1) * d, (kx - 1) * d
                    if (dy, dx) not in mask:
                        mask[(dy, dx)] = hmask[dy] & wmask[dx]

        # --- build the (9*n_br*inner_p, HW) tap stack with static lane rotations ---
        taps = []
        for b, d in enumerate(rates):
            yb = y1[b * inner_p:(b + 1) * inner_p, :]              # sublane-aligned slice
            for ky in range(3):
                for kx in range(3):
                    dy, dx = (ky - 1) * d, (kx - 1) * d
                    s = dy * W + dx                                # static flat shift
                    z = pltpu.roll(yb, shift=(-s) % HW, axis=1) if s else yb
                    taps.append(jnp.where(mask[(dy, dx)], z, 0.0))
        tap_stack = jnp.concatenate(taps, axis=0).astype(jnp.bfloat16)

        # --- all three dilated 3x3 convs (+folded BN) + ReLU as ONE matmul ---
        # Output rows are already the concatenated [feat1; feat2; feat3].
        z3 = jnp.dot(w3_ref[...], tap_stack, preferred_element_type=jnp.float32)
        z3 = jnp.maximum(z3 + b3, 0.0).astype(jnp.bfloat16)        # (n_br*inner, HW)

        # --- projection 1x1 conv (+folded BN) + ReLU ---
        out = jnp.dot(wp_ref[...], z3, preferred_element_type=jnp.float32)
        o_ref[0] = jnp.maximum(out + bp, 0.0).astype(o_ref.dtype)

    return kernel


# ----------------------------------------------------------------------------
# Weight packing (plain JAX, trace-time)
# ----------------------------------------------------------------------------
def _pack_params(params, inner, inner_p):
    brs = ("b1", "b2", "b3")
    cin = params["b1"]["w1"].shape[1]
    pad = inner_p - inner

    # Branch 1x1 weights/biases, rows padded per-branch to inner_p (sublane alignment).
    w1_rows, b1_rows = [], []
    for br in brs:
        w1_rows.append(params[br]["w1"])
        b1_rows.append(params[br]["b1"])
        if pad:
            w1_rows.append(jnp.zeros((pad, cin), jnp.float32))
            b1_rows.append(jnp.zeros((pad,), jnp.float32))
    w1_all = jnp.concatenate(w1_rows, axis=0)                       # (3*inner_p, Cin)
    b1_all = jnp.concatenate(b1_rows, axis=0)[:, None]              # (3*inner_p, 1)

    # Block-diagonal dilated 3x3 weight: rows = branch output channels, columns =
    # (branch, tap, padded input channel), matching the kernel's tap-stack order.
    w3_bd = jnp.zeros((3 * inner, 27 * inner_p), jnp.float32)
    for b, br in enumerate(brs):
        # (Co, Ci, ky, kx) -> (tap=ky*3+kx, Co, Ci)
        w_t = jnp.transpose(params[br]["w3"], (2, 3, 0, 1)).reshape(9, inner, inner)
        for t in range(9):
            c0 = (b * 9 + t) * inner_p
            w3_bd = w3_bd.at[b * inner:(b + 1) * inner, c0:c0 + inner].set(w_t[t])
    b3_all = jnp.concatenate([params[br]["b3"] for br in brs], axis=0)[:, None]

    wp = params["pro"]["w"]                                         # (Cout, 3*inner)
    bp = params["pro"]["b"][:, None]                                # (Cout, 1)

    bias = jnp.concatenate([b1_all, b3_all, bp], axis=0)            # merged f32 biases
    return (w1_all.astype(jnp.bfloat16), w3_bd.astype(jnp.bfloat16),
            wp.astype(jnp.bfloat16), bias)


# ----------------------------------------------------------------------------
# Forward pass (single fused pallas_call)
# ----------------------------------------------------------------------------
@jax.jit
def mrf_forward(x_nchw, params):
    N, Cin, H, W = x_nchw.shape
    assert Cin % 4 == 0
    inner = Cin // 4
    inner_p = -(-inner // 8) * 8                 # sublane-aligned branch width
    Cout = params["pro"]["w"].shape[0]
    HW = H * W

    w1_all, w3_bd, wp, bias = _pack_params(params, inner, inner_p)
    x2 = x_nchw.reshape(N, Cin, HW).astype(jnp.bfloat16)   # free reshape, NCHW native

    kernel = _make_mrf_kernel(H, W, inner, inner_p, RATES)
    out2 = pl.pallas_call(
        kernel,
        out_shape=jax.ShapeDtypeStruct((N, Cout, HW), jnp.float32),
        grid=(N,),
        in_specs=[
            pl.BlockSpec((1, Cin, HW), lambda n: (n, 0, 0)),
            pl.BlockSpec((3 * inner_p, Cin), lambda n: (0, 0)),
            pl.BlockSpec((3 * inner, 27 * inner_p), lambda n: (0, 0)),
            pl.BlockSpec((Cout, 3 * inner), lambda n: (0, 0)),
            pl.BlockSpec((3 * inner_p + 3 * inner + Cout, 1), lambda n: (0, 0)),
        ],
        out_specs=pl.BlockSpec((1, Cout, HW), lambda n: (n, 0, 0)),
        compiler_params=pltpu.CompilerParams(dimension_semantics=("parallel",)),
    )(x2, w1_all, w3_bd, wp, bias)
    return out2.reshape(N, Cout, H, W)


# ----------------------------------------------------------------------------
# Parameter construction (deterministic, synthetic) + BN folding
# ----------------------------------------------------------------------------
def init_mrf_params(key, in_channels, out_channels):
    inner = in_channels // 4
    keys = iter(jax.random.split(key, 64))

    def conv_w(shape, fan_in):
        return jax.random.normal(next(keys), shape, jnp.float32) * (fan_in ** -0.5)

    def bn(c):
        gamma = 1.0 + 0.1 * jax.random.normal(next(keys), (c,), jnp.float32)
        beta = 0.1 * jax.random.normal(next(keys), (c,), jnp.float32)
        mean = 0.1 * jax.random.normal(next(keys), (c,), jnp.float32)
        var = jnp.abs(jax.random.normal(next(keys), (c,), jnp.float32)) + 0.5
        return gamma, beta, mean, var

    def fold(w, b, gamma, beta, mean, var, eps=1e-5):
        scale = gamma / jnp.sqrt(var + eps)
        w = w * scale.reshape((-1,) + (1,) * (w.ndim - 1))
        b = (b - mean) * scale + beta
        return w, b

    params = {}
    for br in ("b1", "b2", "b3"):
        w1 = conv_w((inner, in_channels), in_channels)                  # (Co, Ci) 1x1
        b1 = 0.05 * jax.random.normal(next(keys), (inner,), jnp.float32)
        w1, b1 = fold(w1, b1, *bn(inner))
        w3 = conv_w((inner, inner, 3, 3), inner * 9)                    # OIHW 3x3
        b3 = 0.05 * jax.random.normal(next(keys), (inner,), jnp.float32)
        w3, b3 = fold(w3, b3, *bn(inner))
        params[br] = {"w1": w1, "b1": b1, "w3": w3, "b3": b3}
    wp = conv_w((out_channels, inner * 3), inner * 3)                   # (Co, Ci) 1x1
    bp = 0.05 * jax.random.normal(next(keys), (out_channels,), jnp.float32)
    wp, bp = fold(wp, bp, *bn(out_channels))
    params["pro"] = {"w": wp, "b": bp}
    return params


# ----------------------------------------------------------------------------
# Pure-JAX reference (lax conv, f32) for validation
# ----------------------------------------------------------------------------
def mrf_forward_reference(x_nchw, params):
    x = x_nchw.astype(jnp.float32)

    def pw(h, w, b):
        return jax.nn.relu(jnp.einsum("nchw,oc->nohw", h, w) + b[None, :, None, None])

    def dil(h, w, b, d):
        y = jax.lax.conv_general_dilated(
            h, w, window_strides=(1, 1), padding=((d, d), (d, d)),
            rhs_dilation=(d, d), dimension_numbers=("NCHW", "OIHW", "NCHW"))
        return jax.nn.relu(y + b[None, :, None, None])

    feats = []
    for br, d in zip(("b1", "b2", "b3"), RATES):
        p = params[br]
        h = pw(x, p["w1"], p["b1"])
        h = dil(h, p["w3"], p["b3"], d)
        feats.append(h)
    cat = jnp.concatenate(feats, axis=1)
    return pw(cat, params["pro"]["w"], params["pro"]["b"])


# ----------------------------------------------------------------------------
if __name__ == "__main__":
    key = jax.random.PRNGKey(0)
    k_in, k_par = jax.random.split(key)

    N, C_in, C_out, H, W = 2, 16, 16, 16, 16        # inner_channels = 4
    x = jax.random.normal(k_in, (N, C_in, H, W), jnp.float32)  # NCHW, like PyTorch
    params = init_mrf_params(k_par, C_in, C_out)

    out = jax.block_until_ready(mrf_forward(x, params))
    ref = mrf_forward_reference(x, params)

    assert out.shape == (N, C_out, H, W), out.shape
    # Tolerance covers bf16 MXU operands (f32 accumulation) vs. the f32 lax.conv ref.
    max_err = float(jnp.max(jnp.abs(out - ref)))
    assert jnp.allclose(out, ref, atol=1e-1, rtol=1e-1), max_err

    print("KERNEL_OK")
</pallas_src>

<mosaic_0001>
module attributes {stable_mosaic.version = 11 : i64} {
  func.func @kernel(%arg0: i32, %arg1: memref<1x16x256xbf16, #tpu.memory_space<vmem>>, %arg2: memref<24x16xbf16, #tpu.memory_space<vmem>>, %arg3: memref<12x216xbf16, #tpu.memory_space<vmem>>, %arg4: memref<16x12xbf16, #tpu.memory_space<vmem>>, %arg5: memref<52x1xf32, #tpu.memory_space<vmem>>, %arg6: memref<1x16x256xf32, #tpu.memory_space<vmem>>) attributes {dimension_semantics = [#tpu.dimension_semantics<parallel>], iteration_bounds = array<i64: 2>, scalar_prefetch = 0 : i64, scratch_operands = 0 : i64, tpu.core_type = #tpu.core_type<tc>, window_params = [{transform_indices = @transform_0, window_bounds = array<i64: 1, 16, 256>}, {pipeline_mode = #tpu.pipeline_mode<synchronous>, transform_indices = @transform_1, window_bounds = array<i64: 24, 16>}, {pipeline_mode = #tpu.pipeline_mode<synchronous>, transform_indices = @transform_2, window_bounds = array<i64: 12, 216>}, {pipeline_mode = #tpu.pipeline_mode<synchronous>, transform_indices = @transform_3, window_bounds = array<i64: 16, 12>}, {pipeline_mode = #tpu.pipeline_mode<synchronous>, transform_indices = @transform_4, window_bounds = array<i64: 52, 1>}, {transform_indices = @transform_5, window_bounds = array<i64: 1, 16, 256>}]} {
    %c0 = arith.constant 0 : index
    %c0_0 = arith.constant 0 : index
    %0 = vector.load %arg5[%c0, %c0_0] : memref<52x1xf32, #tpu.memory_space<vmem>>, vector<52x1xf32>
    %1 = vector.extract_strided_slice %0 {offsets = [0, 0], sizes = [24, 1], strides = [1, 1]} : vector<52x1xf32> to vector<24x1xf32>
    %2 = vector.extract_strided_slice %0 {offsets = [24, 0], sizes = [12, 1], strides = [1, 1]} : vector<52x1xf32> to vector<12x1xf32>
    %3 = vector.extract_strided_slice %0 {offsets = [36, 0], sizes = [16, 1], strides = [1, 1]} : vector<52x1xf32> to vector<16x1xf32>
    %c0_1 = arith.constant 0 : index
    %c0_2 = arith.constant 0 : index
    %c0_3 = arith.constant 0 : index
    %4 = vector.load %arg1[%c0_1, %c0_2, %c0_3] : memref<1x16x256xbf16, #tpu.memory_space<vmem>>, vector<1x16x256xbf16>
    %5 = vector.shape_cast %4 : vector<1x16x256xbf16> to vector<16x256xbf16>
    %c0_4 = arith.constant 0 : index
    %c0_5 = arith.constant 0 : index
    %6 = vector.load %arg2[%c0_4, %c0_5] : memref<24x16xbf16, #tpu.memory_space<vmem>>, vector<24x16xbf16>
    %cst = arith.constant dense<0.000000e+00> : vector<24x256xf32>
    %7 = tpu.matmul %6, %5, %cst {dimension_numbers = #tpu.dot_dimension_numbers<[1], [0], [0], [1], [0, 0, 1, 1], [], []>} : vector<24x16xbf16>, vector<16x256xbf16>, vector<24x256xf32> -> vector<24x256xf32>
    %8 = vector.broadcast %1 : vector<24x1xf32> to vector<24x256xf32>
    %9 = arith.addf %7, %8 : vector<24x256xf32>
    %cst_6 = arith.constant 0.000000e+00 : f32
    %10 = vector.broadcast %cst_6 : f32 to vector<24x256xf32>
    %11 = arith.maximumf %9, %10 : vector<24x256xf32>
    %12 = tpu.iota {dimensions = array<i32: 1>} : vector<1x256xi32>
    %c15_i32 = arith.constant 15 : i32
    %13 = vector.broadcast %c15_i32 : i32 to vector<1x256xi32>
    %14 = arith.andi %12, %13 : vector<1x256xi32>
    %c64_i32 = arith.constant 64 : i32
    %15 = vector.broadcast %c64_i32 : i32 to vector<1x256xi32>
    %16 = arith.cmpi sge, %12, %15 : vector<1x256xi32>
    %c256_i32 = arith.constant 256 : i32
    %17 = vector.broadcast %c256_i32 : i32 to vector<1x256xi32>
    %18 = arith.cmpi slt, %12, %17 : vector<1x256xi32>
    %19 = arith.andi %16, %18 : vector<1x256xi1>
    %c32_i32 = arith.constant 32 : i32
    %20 = vector.broadcast %c32_i32 : i32 to vector<1x256xi32>
    %21 = arith.cmpi sge, %12, %20 : vector<1x256xi32>
    %c256_i32_7 = arith.constant 256 : i32
    %22 = vector.broadcast %c256_i32_7 : i32 to vector<1x256xi32>
    %23 = arith.cmpi slt, %12, %22 : vector<1x256xi32>
    %24 = arith.andi %21, %23 : vector<1x256xi1>
    %c16_i32 = arith.constant 16 : i32
    %25 = vector.broadcast %c16_i32 : i32 to vector<1x256xi32>
    %26 = arith.cmpi sge, %12, %25 : vector<1x256xi32>
    %c256_i32_8 = arith.constant 256 : i32
    %27 = vector.broadcast %c256_i32_8 : i32 to vector<1x256xi32>
    %28 = arith.cmpi slt, %12, %27 : vector<1x256xi32>
    %29 = arith.andi %26, %28 : vector<1x256xi1>
    %c0_i32 = arith.constant 0 : i32
    %30 = vector.broadcast %c0_i32 : i32 to vector<1x256xi32>
    %31 = arith.cmpi sge, %12, %30 : vector<1x256xi32>
    %c256_i32_9 = arith.constant 256 : i32
    %32 = vector.broadcast %c256_i32_9 : i32 to vector<1x256xi32>
    %33 = arith.cmpi slt, %12, %32 : vector<1x256xi32>
    %34 = arith.andi %31, %33 : vector<1x256xi1>
    %c0_i32_10 = arith.constant 0 : i32
    %35 = vector.broadcast %c0_i32_10 : i32 to vector<1x256xi32>
    %36 = arith.cmpi sge, %12, %35 : vector<1x256xi32>
    %c240_i32 = arith.constant 240 : i32
    %37 = vector.broadcast %c240_i32 : i32 to vector<1x256xi32>
    %38 = arith.cmpi slt, %12, %37 : vector<1x256xi32>
    %39 = arith.andi %36, %38 : vector<1x256xi1>
    %c0_i32_11 = arith.constant 0 : i32
    %40 = vector.broadcast %c0_i32_11 : i32 to vector<1x256xi32>
    %41 = arith.cmpi sge, %12, %40 : vector<1x256xi32>
    %c224_i32 = arith.constant 224 : i32
    %42 = vector.broadcast %c224_i32 : i32 to vector<1x256xi32>
    %43 = arith.cmpi slt, %12, %42 : vector<1x256xi32>
    %44 = arith.andi %41, %43 : vector<1x256xi1>
    %c0_i32_12 = arith.constant 0 : i32
    %45 = vector.broadcast %c0_i32_12 : i32 to vector<1x256xi32>
    %46 = arith.cmpi sge, %12, %45 : vector<1x256xi32>
    %c192_i32 = arith.constant 192 : i32
    %47 = vector.broadcast %c192_i32 : i32 to vector<1x256xi32>
    %48 = arith.cmpi slt, %12, %47 : vector<1x256xi32>
    %49 = arith.andi %46, %48 : vector<1x256xi1>
    %c-4_i32 = arith.constant -4 : i32
    %50 = vector.broadcast %c-4_i32 : i32 to vector<1x256xi32>
    %51 = arith.addi %14, %50 : vector<1x256xi32>
    %c0_i32_13 = arith.constant 0 : i32
    %52 = vector.broadcast %c0_i32_13 : i32 to vector<1x256xi32>
    %53 = arith.cmpi sge, %51, %52 : vector<1x256xi32>
    %c-4_i32_14 = arith.constant -4 : i32
    %54 = vector.broadcast %c-4_i32_14 : i32 to vector<1x256xi32>
    %55 = arith.addi %14, %54 : vector<1x256xi32>
    %c16_i32_15 = arith.constant 16 : i32
    %56 = vector.broadcast %c16_i32_15 : i32 to vector<1x256xi32>
    %57 = arith.cmpi slt, %55, %56 : vector<1x256xi32>
    %58 = arith.andi %53, %57 : vector<1x256xi1>
    %c-2_i32 = arith.constant -2 : i32
    %59 = vector.broadcast %c-2_i32 : i32 to vector<1x256xi32>
    %60 = arith.addi %14, %59 : vector<1x256xi32>
    %c0_i32_16 = arith.constant 0 : i32
    %61 = vector.broadcast %c0_i32_16 : i32 to vector<1x256xi32>
    %62 = arith.cmpi sge, %60, %61 : vector<1x256xi32>
    %c-2_i32_17 = arith.constant -2 : i32
    %63 = vector.broadcast %c-2_i32_17 : i32 to vector<1x256xi32>
    %64 = arith.addi %14, %63 : vector<1x256xi32>
    %c16_i32_18 = arith.constant 16 : i32
    %65 = vector.broadcast %c16_i32_18 : i32 to vector<1x256xi32>
    %66 = arith.cmpi slt, %64, %65 : vector<1x256xi32>
    %67 = arith.andi %62, %66 : vector<1x256xi1>
    %c-1_i32 = arith.constant -1 : i32
    %68 = vector.broadcast %c-1_i32 : i32 to vector<1x256xi32>
    %69 = arith.addi %14, %68 : vector<1x256xi32>
    %c0_i32_19 = arith.constant 0 : i32
    %70 = vector.broadcast %c0_i32_19 : i32 to vector<1x256xi32>
    %71 = arith.cmpi sge, %69, %70 : vector<1x256xi32>
    %c-1_i32_20 = arith.constant -1 : i32
    %72 = vector.broadcast %c-1_i32_20 : i32 to vector<1x256xi32>
    %73 = arith.addi %14, %72 : vector<1x256xi32>
    %c16_i32_21 = arith.constant 16 : i32
    %74 = vector.broadcast %c16_i32_21 : i32 to vector<1x256xi32>
    %75 = arith.cmpi slt, %73, %74 : vector<1x256xi32>
    %76 = arith.andi %71, %75 : vector<1x256xi1>
    %c0_i32_22 = arith.constant 0 : i32
    %77 = vector.broadcast %c0_i32_22 : i32 to vector<1x256xi32>
    %78 = arith.addi %14, %77 : vector<1x256xi32>
    %c0_i32_23 = arith.constant 0 : i32
    %79 = vector.broadcast %c0_i32_23 : i32 to vector<1x256xi32>
    %80 = arith.cmpi sge, %78, %79 : vector<1x256xi32>
    %c0_i32_24 = arith.constant 0 : i32
    %81 = vector.broadcast %c0_i32_24 : i32 to vector<1x256xi32>
    %82 = arith.addi %14, %81 : vector<1x256xi32>
    %c16_i32_25 = arith.constant 16 : i32
    %83 = vector.broadcast %c16_i32_25 : i32 to vector<1x256xi32>
    %84 = arith.cmpi slt, %82, %83 : vector<1x256xi32>
    %85 = arith.andi %80, %84 : vector<1x256xi1>
    %c1_i32 = arith.constant 1 : i32
    %86 = vector.broadcast %c1_i32 : i32 to vector<1x256xi32>
    %87 = arith.addi %14, %86 : vector<1x256xi32>
    %c0_i32_26 = arith.constant 0 : i32
    %88 = vector.broadcast %c0_i32_26 : i32 to vector<1x256xi32>
    %89 = arith.cmpi sge, %87, %88 : vector<1x256xi32>
    %c1_i32_27 = arith.constant 1 : i32
    %90 = vector.broadcast %c1_i32_27 : i32 to vector<1x256xi32>
    %91 = arith.addi %14, %90 : vector<1x256xi32>
    %c16_i32_28 = arith.constant 16 : i32
    %92 = vector.broadcast %c16_i32_28 : i32 to vector<1x256xi32>
    %93 = arith.cmpi slt, %91, %92 : vector<1x256xi32>
    %94 = arith.andi %89, %93 : vector<1x256xi1>
    %c2_i32 = arith.constant 2 : i32
    %95 = vector.broadcast %c2_i32 : i32 to vector<1x256xi32>
    %96 = arith.addi %14, %95 : vector<1x256xi32>
    %c0_i32_29 = arith.constant 0 : i32
    %97 = vector.broadcast %c0_i32_29 : i32 to vector<1x256xi32>
    %98 = arith.cmpi sge, %96, %97 : vector<1x256xi32>
    %c2_i32_30 = arith.constant 2 : i32
    %99 = vector.broadcast %c2_i32_30 : i32 to vector<1x256xi32>
    %100 = arith.addi %14, %99 : vector<1x256xi32>
    %c16_i32_31 = arith.constant 16 : i32
    %101 = vector.broadcast %c16_i32_31 : i32 to vector<1x256xi32>
    %102 = arith.cmpi slt, %100, %101 : vector<1x256xi32>
    %103 = arith.andi %98, %102 : vector<1x256xi1>
    %c4_i32 = arith.constant 4 : i32
    %104 = vector.broadcast %c4_i32 : i32 to vector<1x256xi32>
    %105 = arith.addi %14, %104 : vector<1x256xi32>
    %c0_i32_32 = arith.constant 0 : i32
    %106 = vector.broadcast %c0_i32_32 : i32 to vector<1x256xi32>
    %107 = arith.cmpi sge, %105, %106 : vector<1x256xi32>
    %c4_i32_33 = arith.constant 4 : i32
    %108 = vector.broadcast %c4_i32_33 : i32 to vector<1x256xi32>
    %109 = arith.addi %14, %108 : vector<1x256xi32>
    %c16_i32_34 = arith.constant 16 : i32
    %110 = vector.broadcast %c16_i32_34 : i32 to vector<1x256xi32>
    %111 = arith.cmpi slt, %109, %110 : vector<1x256xi32>
    %112 = arith.andi %107, %111 : vector<1x256xi1>
    %113 = arith.andi %29, %76 : vector<1x256xi1>
    %114 = arith.andi %29, %85 : vector<1x256xi1>
    %115 = arith.andi %29, %94 : vector<1x256xi1>
    %116 = arith.andi %34, %76 : vector<1x256xi1>
    %117 = arith.andi %34, %85 : vector<1x256xi1>
    %118 = arith.andi %34, %94 : vector<1x256xi1>
    %119 = arith.andi %39, %76 : vector<1x256xi1>
    %120 = arith.andi %39, %85 : vector<1x256xi1>
    %121 = arith.andi %39, %94 : vector<1x256xi1>
    %122 = arith.andi %24, %67 : vector<1x256xi1>
    %123 = arith.andi %24, %85 : vector<1x256xi1>
    %124 = arith.andi %24, %103 : vector<1x256xi1>
    %125 = arith.andi %34, %67 : vector<1x256xi1>
    %126 = arith.andi %34, %103 : vector<1x256xi1>
    %127 = arith.andi %44, %67 : vector<1x256xi1>
    %128 = arith.andi %44, %85 : vector<1x256xi1>
    %129 = arith.andi %44, %103 : vector<1x256xi1>
    %130 = arith.andi %19, %58 : vector<1x256xi1>
    %131 = arith.andi %19, %85 : vector<1x256xi1>
    %132 = arith.andi %19, %112 : vector<1x256xi1>
    %133 = arith.andi %34, %58 : vector<1x256xi1>
    %134 = arith.andi %34, %112 : vector<1x256xi1>
    %135 = arith.andi %49, %58 : vector<1x256xi1>
    %136 = arith.andi %49, %85 : vector<1x256xi1>
    %137 = arith.andi %49, %112 : vector<1x256xi1>
    %138 = vector.extract_strided_slice %11 {offsets = [0, 0], sizes = [8, 256], strides = [1, 1]} : vector<24x256xf32> to vector<8x256xf32>
    %c17_i32 = arith.constant 17 : i32
    %139 = tpu.dynamic_rotate %138 by %c17_i32 dim 1 : vector<8x256xf32>, i32 -> vector<8x256xf32>
    %cst_35 = arith.constant 0.000000e+00 : f32
    %140 = vector.shape_cast %113 : vector<1x256xi1> to vector<1x256xi1>
    %141 = vector.broadcast %140 : vector<1x256xi1> to vector<8x256xi1>
    %142 = vector.broadcast %cst_35 : f32 to vector<8x256xf32>
    %143 = arith.select %141, %139, %142 : vector<8x256xi1>, vector<8x256xf32>
    %c16_i32_36 = arith.constant 16 : i32
    %144 = tpu.dynamic_rotate %138 by %c16_i32_36 dim 1 : vector<8x256xf32>, i32 -> vector<8x256xf32>
    %cst_37 = arith.constant 0.000000e+00 : f32
    %145 = vector.shape_cast %114 : vector<1x256xi1> to vector<1x256xi1>
    %146 = vector.broadcast %145 : vector<1x256xi1> to vector<8x256xi1>
    %147 = vector.broadcast %cst_37 : f32 to vector<8x256xf32>
    %148 = arith.select %146, %144, %147 : vector<8x256xi1>, vector<8x256xf32>
    %c15_i32_38 = arith.constant 15 : i32
    %149 = tpu.dynamic_rotate %138 by %c15_i32_38 dim 1 : vector<8x256xf32>, i32 -> vector<8x256xf32>
    %cst_39 = arith.constant 0.000000e+00 : f32
    %150 = vector.shape_cast %115 : vector<1x256xi1> to vector<1x256xi1>
    %151 = vector.broadcast %150 : vector<1x256xi1> to vector<8x256xi1>
    %152 = vector.broadcast %cst_39 : f32 to vector<8x256xf32>
    %153 = arith.select %151, %149, %152 : vector<8x256xi1>, vector<8x256xf32>
    %c1_i32_40 = arith.constant 1 : i32
    %154 = tpu.dynamic_rotate %138 by %c1_i32_40 dim 1 : vector<8x256xf32>, i32 -> vector<8x256xf32>
    %cst_41 = arith.constant 0.000000e+00 : f32
    %155 = vector.shape_cast %116 : vector<1x256xi1> to vector<1x256xi1>
    %156 = vector.broadcast %155 : vector<1x256xi1> to vector<8x256xi1>
    %157 = vector.broadcast %cst_41 : f32 to vector<8x256xf32>
    %158 = arith.select %156, %154, %157 : vector<8x256xi1>, vector<8x256xf32>
    %cst_42 = arith.constant 0.000000e+00 : f32
    %159 = vector.shape_cast %117 : vector<1x256xi1> to vector<1x256xi1>
    %160 = vector.broadcast %159 : vector<1x256xi1> to vector<8x256xi1>
    %161 = vector.broadcast %cst_42 : f32 to vector<8x256xf32>
    %162 = arith.select %160, %138, %161 : vector<8x256xi1>, vector<8x256xf32>
    %c255_i32 = arith.constant 255 : i32
    %163 = tpu.dynamic_rotate %138 by %c255_i32 dim 1 : vector<8x256xf32>, i32 -> vector<8x256xf32>
    %cst_43 = arith.constant 0.000000e+00 : f32
    %164 = vector.shape_cast %118 : vector<1x256xi1> to vector<1x256xi1>
    %165 = vector.broadcast %164 : vector<1x256xi1> to vector<8x256xi1>
    %166 = vector.broadcast %cst_43 : f32 to vector<8x256xf32>
    %167 = arith.select %165, %163, %166 : vector<8x256xi1>, vector<8x256xf32>
    %c241_i32 = arith.constant 241 : i32
    %168 = tpu.dynamic_rotate %138 by %c241_i32 dim 1 : vector<8x256xf32>, i32 -> vector<8x256xf32>
    %cst_44 = arith.constant 0.000000e+00 : f32
    %169 = vector.shape_cast %119 : vector<1x256xi1> to vector<1x256xi1>
    %170 = vector.broadcast %169 : vector<1x256xi1> to vector<8x256xi1>
    %171 = vector.broadcast %cst_44 : f32 to vector<8x256xf32>
    %172 = arith.select %170, %168, %171 : vector<8x256xi1>, vector<8x256xf32>
    %c240_i32_45 = arith.constant 240 : i32
    %173 = tpu.dynamic_rotate %138 by %c240_i32_45 dim 1 : vector<8x256xf32>, i32 -> vector<8x256xf32>
    %cst_46 = arith.constant 0.000000e+00 : f32
    %174 = vector.shape_cast %120 : vector<1x256xi1> to vector<1x256xi1>
    %175 = vector.broadcast %174 : vector<1x256xi1> to vector<8x256xi1>
    %176 = vector.broadcast %cst_46 : f32 to vector<8x256xf32>
    %177 = arith.select %175, %173, %176 : vector<8x256xi1>, vector<8x256xf32>
    %c239_i32 = arith.constant 239 : i32
    %178 = tpu.dynamic_rotate %138 by %c239_i32 dim 1 : vector<8x256xf32>, i32 -> vector<8x256xf32>
    %cst_47 = arith.constant 0.000000e+00 : f32
    %179 = vector.shape_cast %121 : vector<1x256xi1> to vector<1x256xi1>
    %180 = vector.broadcast %179 : vector<1x256xi1> to vector<8x256xi1>
    %181 = vector.broadcast %cst_47 : f32 to vector<8x256xf32>
    %182 = arith.select %180, %178, %181 : vector<8x256xi1>, vector<8x256xf32>
    %183 = vector.extract_strided_slice %11 {offsets = [8, 0], sizes = [8, 256], strides = [1, 1]} : vector<24x256xf32> to vector<8x256xf32>
    %c34_i32 = arith.constant 34 : i32
    %184 = tpu.dynamic_rotate %183 by %c34_i32 dim 1 : vector<8x256xf32>, i32 -> vector<8x256xf32>
    %cst_48 = arith.constant 0.000000e+00 : f32
    %185 = vector.shape_cast %122 : vector<1x256xi1> to vector<1x256xi1>
    %186 = vector.broadcast %185 : vector<1x256xi1> to vector<8x256xi1>
    %187 = vector.broadcast %cst_48 : f32 to vector<8x256xf32>
    %188 = arith.select %186, %184, %187 : vector<8x256xi1>, vector<8x256xf32>
    %c32_i32_49 = arith.constant 32 : i32
    %189 = tpu.dynamic_rotate %183 by %c32_i32_49 dim 1 : vector<8x256xf32>, i32 -> vector<8x256xf32>
    %cst_50 = arith.constant 0.000000e+00 : f32
    %190 = vector.shape_cast %123 : vector<1x256xi1> to vector<1x256xi1>
    %191 = vector.broadcast %190 : vector<1x256xi1> to vector<8x256xi1>
    %192 = vector.broadcast %cst_50 : f32 to vector<8x256xf32>
    %193 = arith.select %191, %189, %192 : vector<8x256xi1>, vector<8x256xf32>
    %c30_i32 = arith.constant 30 : i32
    %194 = tpu.dynamic_rotate %183 by %c30_i32 dim 1 : vector<8x256xf32>, i32 -> vector<8x256xf32>
    %cst_51 = arith.constant 0.000000e+00 : f32
    %195 = vector.shape_cast %124 : vector<1x256xi1> to vector<1x256xi1>
    %196 = vector.broadcast %195 : vector<1x256xi1> to vector<8x256xi1>
    %197 = vector.broadcast %cst_51 : f32 to vector<8x256xf32>
    %198 = arith.select %196, %194, %197 : vector<8x256xi1>, vector<8x256xf32>
    %c2_i32_52 = arith.constant 2 : i32
    %199 = tpu.dynamic_rotate %183 by %c2_i32_52 dim 1 : vector<8x256xf32>, i32 -> vector<8x256xf32>
    %cst_53 = arith.constant 0.000000e+00 : f32
    %200 = vector.shape_cast %125 : vector<1x256xi1> to vector<1x256xi1>
    %201 = vector.broadcast %200 : vector<1x256xi1> to vector<8x256xi1>
    %202 = vector.broadcast %cst_53 : f32 to vector<8x256xf32>
    %203 = arith.select %201, %199, %202 : vector<8x256xi1>, vector<8x256xf32>
    %cst_54 = arith.constant 0.000000e+00 : f32
    %204 = vector.shape_cast %117 : vector<1x256xi1> to vector<1x256xi1>
    %205 = vector.broadcast %204 : vector<1x256xi1> to vector<8x256xi1>
    %206 = vector.broadcast %cst_54 : f32 to vector<8x256xf32>
    %207 = arith.select %205, %183, %206 : vector<8x256xi1>, vector<8x256xf32>
    %c254_i32 = arith.constant 254 : i32
    %208 = tpu.dynamic_rotate %183 by %c254_i32 dim 1 : vector<8x256xf32>, i32 -> vector<8x256xf32>
    %cst_55 = arith.constant 0.000000e+00 : f32
    %209 = vector.shape_cast %126 : vector<1x256xi1> to vector<1x256xi1>
    %210 = vector.broadcast %209 : vector<1x256xi1> to vector<8x256xi1>
    %211 = vector.broadcast %cst_55 : f32 to vector<8x256xf32>
    %212 = arith.select %210, %208, %211 : vector<8x256xi1>, vector<8x256xf32>
    %c226_i32 = arith.constant 226 : i32
    %213 = tpu.dynamic_rotate %183 by %c226_i32 dim 1 : vector<8x256xf32>, i32 -> vector<8x256xf32>
    %cst_56 = arith.constant 0.000000e+00 : f32
    %214 = vector.shape_cast %127 : vector<1x256xi1> to vector<1x256xi1>
    %215 = vector.broadcast %214 : vector<1x256xi1> to vector<8x256xi1>
    %216 = vector.broadcast %cst_56 : f32 to vector<8x256xf32>
    %217 = arith.select %215, %213, %216 : vector<8x256xi1>, vector<8x256xf32>
    %c224_i32_57 = arith.constant 224 : i32
    %218 = tpu.dynamic_rotate %183 by %c224_i32_57 dim 1 : vector<8x256xf32>, i32 -> vector<8x256xf32>
    %cst_58 = arith.constant 0.000000e+00 : f32
    %219 = vector.shape_cast %128 : vector<1x256xi1> to vector<1x256xi1>
    %220 = vector.broadcast %219 : vector<1x256xi1> to vector<8x256xi1>
    %221 = vector.broadcast %cst_58 : f32 to vector<8x256xf32>
    %222 = arith.select %220, %218, %221 : vector<8x256xi1>, vector<8x256xf32>
    %c222_i32 = arith.constant 222 : i32
    %223 = tpu.dynamic_rotate %183 by %c222_i32 dim 1 : vector<8x256xf32>, i32 -> vector<8x256xf32>
    %cst_59 = arith.constant 0.000000e+00 : f32
    %224 = vector.shape_cast %129 : vector<1x256xi1> to vector<1x256xi1>
    %225 = vector.broadcast %224 : vector<1x256xi1> to vector<8x256xi1>
    %226 = vector.broadcast %cst_59 : f32 to vector<8x256xf32>
    %227 = arith.select %225, %223, %226 : vector<8x256xi1>, vector<8x256xf32>
    %228 = vector.extract_strided_slice %11 {offsets = [16, 0], sizes = [8, 256], strides = [1, 1]} : vector<24x256xf32> to vector<8x256xf32>
    %c68_i32 = arith.constant 68 : i32
    %229 = tpu.dynamic_rotate %228 by %c68_i32 dim 1 : vector<8x256xf32>, i32 -> vector<8x256xf32>
    %cst_60 = arith.constant 0.000000e+00 : f32
    %230 = vector.shape_cast %130 : vector<1x256xi1> to vector<1x256xi1>
    %231 = vector.broadcast %230 : vector<1x256xi1> to vector<8x256xi1>
    %232 = vector.broadcast %cst_60 : f32 to vector<8x256xf32>
    %233 = arith.select %231, %229, %232 : vector<8x256xi1>, vector<8x256xf32>
    %c64_i32_61 = arith.constant 64 : i32
    %234 = tpu.dynamic_rotate %228 by %c64_i32_61 dim 1 : vector<8x256xf32>, i32 -> vector<8x256xf32>
    %cst_62 = arith.constant 0.000000e+00 : f32
    %235 = vector.shape_cast %131 : vector<1x256xi1> to vector<1x256xi1>
    %236 = vector.broadcast %235 : vector<1x256xi1> to vector<8x256xi1>
    %237 = vector.broadcast %cst_62 : f32 to vector<8x256xf32>
    %238 = arith.select %236, %234, %237 : vector<8x256xi1>, vector<8x256xf32>
    %c60_i32 = arith.constant 60 : i32
    %239 = tpu.dynamic_rotate %228 by %c60_i32 dim 1 : vector<8x256xf32>, i32 -> vector<8x256xf32>
    %cst_63 = arith.constant 0.000000e+00 : f32
    %240 = vector.shape_cast %132 : vector<1x256xi1> to vector<1x256xi1>
    %241 = vector.broadcast %240 : vector<1x256xi1> to vector<8x256xi1>
    %242 = vector.broadcast %cst_63 : f32 to vector<8x256xf32>
    %243 = arith.select %241, %239, %242 : vector<8x256xi1>, vector<8x256xf32>
    %c4_i32_64 = arith.constant 4 : i32
    %244 = tpu.dynamic_rotate %228 by %c4_i32_64 dim 1 : vector<8x256xf32>, i32 -> vector<8x256xf32>
    %cst_65 = arith.constant 0.000000e+00 : f32
    %245 = vector.shape_cast %133 : vector<1x256xi1> to vector<1x256xi1>
    %246 = vector.broadcast %245 : vector<1x256xi1> to vector<8x256xi1>
    %247 = vector.broadcast %cst_65 : f32 to vector<8x256xf32>
    %248 = arith.select %246, %244, %247 : vector<8x256xi1>, vector<8x256xf32>
    %cst_66 = arith.constant 0.000000e+00 : f32
    %249 = vector.shape_cast %117 : vector<1x256xi1> to vector<1x256xi1>
    %250 = vector.broadcast %249 : vector<1x256xi1> to vector<8x256xi1>
    %251 = vector.broadcast %cst_66 : f32 to vector<8x256xf32>
    %252 = arith.select %250, %228, %251 : vector<8x256xi1>, vector<8x256xf32>
    %c252_i32 = arith.constant 252 : i32
    %253 = tpu.dynamic_rotate %228 by %c252_i32 dim 1 : vector<8x256xf32>, i32 -> vector<8x256xf32>
    %cst_67 = arith.constant 0.000000e+00 : f32
    %254 = vector.shape_cast %134 : vector<1x256xi1> to vector<1x256xi1>
    %255 = vector.broadcast %254 : vector<1x256xi1> to vector<8x256xi1>
    %256 = vector.broadcast %cst_67 : f32 to vector<8x256xf32>
    %257 = arith.select %255, %253, %256 : vector<8x256xi1>, vector<8x256xf32>
    %c196_i32 = arith.constant 196 : i32
    %258 = tpu.dynamic_rotate %228 by %c196_i32 dim 1 : vector<8x256xf32>, i32 -> vector<8x256xf32>
    %cst_68 = arith.constant 0.000000e+00 : f32
    %259 = vector.shape_cast %135 : vector<1x256xi1> to vector<1x256xi1>
    %260 = vector.broadcast %259 : vector<1x256xi1> to vector<8x256xi1>
    %261 = vector.broadcast %cst_68 : f32 to vector<8x256xf32>
    %262 = arith.select %260, %258, %261 : vector<8x256xi1>, vector<8x256xf32>
    %c192_i32_69 = arith.constant 192 : i32
    %263 = tpu.dynamic_rotate %228 by %c192_i32_69 dim 1 : vector<8x256xf32>, i32 -> vector<8x256xf32>
    %cst_70 = arith.constant 0.000000e+00 : f32
    %264 = vector.shape_cast %136 : vector<1x256xi1> to vector<1x256xi1>
    %265 = vector.broadcast %264 : vector<1x256xi1> to vector<8x256xi1>
    %266 = vector.broadcast %cst_70 : f32 to vector<8x256xf32>
    %267 = arith.select %265, %263, %266 : vector<8x256xi1>, vector<8x256xf32>
    %c188_i32 = arith.constant 188 : i32
    %268 = tpu.dynamic_rotate %228 by %c188_i32 dim 1 : vector<8x256xf32>, i32 -> vector<8x256xf32>
    %cst_71 = arith.constant 0.000000e+00 : f32
    %269 = vector.shape_cast %137 : vector<1x256xi1> to vector<1x256xi1>
    %270 = vector.broadcast %269 : vector<1x256xi1> to vector<8x256xi1>
    %271 = vector.broadcast %cst_71 : f32 to vector<8x256xf32>
    %272 = arith.select %270, %268, %271 : vector<8x256xi1>, vector<8x256xf32>
    %273 = tpu.concatenate %143, %148, %153, %158, %162, %167, %172, %177, %182, %188, %193, %198, %203, %207, %212, %217 in 0 : vector<8x256xf32>, vector<8x256xf32>, vector<8x256xf32>, vector<8x256xf32>, vector<8x256xf32>, vector<8x256xf32>, vector<8x256xf32>, vector<8x256xf32>, vector<8x256xf32>, vector<8x256xf32>, vector<8x256xf32>, vector<8x256xf32>, vector<8x256xf32>, vector<8x256xf32>, vector<8x256xf32>, vector<8x256xf32> -> vector<128x256xf32>
    %274 = tpu.concatenate %222, %227, %233, %238, %243, %248, %252, %257, %262, %267, %272 in 0 : vector<8x256xf32>, vector<8x256xf32>, vector<8x256xf32>, vector<8x256xf32>, vector<8x256xf32>, vector<8x256xf32>, vector<8x256xf32>, vector<8x256xf32>, vector<8x256xf32>, vector<8x256xf32>, vector<8x256xf32> -> vector<88x256xf32>
    %275 = tpu.concatenate %273, %274 in 0 : vector<128x256xf32>, vector<88x256xf32> -> vector<216x256xf32>
    %276 = arith.truncf %275 : vector<216x256xf32> to vector<216x256xbf16>
    %c0_72 = arith.constant 0 : index
    %c0_73 = arith.constant 0 : index
    %277 = vector.load %arg3[%c0_72, %c0_73] : memref<12x216xbf16, #tpu.memory_space<vmem>>, vector<12x216xbf16>
    %cst_74 = arith.constant dense<0.000000e+00> : vector<12x256xf32>
    %278 = tpu.matmul %277, %276, %cst_74 {dimension_numbers = #tpu.dot_dimension_numbers<[1], [0], [0], [1], [0, 0, 1, 1], [], []>} : vector<12x216xbf16>, vector<216x256xbf16>, vector<12x256xf32> -> vector<12x256xf32>
    %279 = vector.broadcast %2 : vector<12x1xf32> to vector<12x256xf32>
    %280 = arith.addf %278, %279 : vector<12x256xf32>
    %cst_75 = arith.constant 0.000000e+00 : f32
    %281 = vector.broadcast %cst_75 : f32 to vector<12x256xf32>
    %282 = arith.maximumf %280, %281 : vector<12x256xf32>
    %283 = arith.truncf %282 : vector<12x256xf32> to vector<12x256xbf16>
    %c0_76 = arith.constant 0 : index
    %c0_77 = arith.constant 0 : index
    %284 = vector.load %arg4[%c0_76, %c0_77] : memref<16x12xbf16, #tpu.memory_space<vmem>>, vector<16x12xbf16>
    %cst_78 = arith.constant dense<0.000000e+00> : vector<16x256xf32>
    %285 = tpu.matmul %284, %283, %cst_78 {dimension_numbers = #tpu.dot_dimension_numbers<[1], [0], [0], [1], [0, 0, 1, 1], [], []>} : vector<16x12xbf16>, vector<12x256xbf16>, vector<16x256xf32> -> vector<16x256xf32>
    %286 = vector.broadcast %3 : vector<16x1xf32> to vector<16x256xf32>
    %287 = arith.addf %285, %286 : vector<16x256xf32>
    %cst_79 = arith.constant 0.000000e+00 : f32
    %288 = vector.broadcast %cst_79 : f32 to vector<16x256xf32>
    %289 = arith.maximumf %287, %288 : vector<16x256xf32>
    %c0_80 = arith.constant 0 : index
    %c0_81 = arith.constant 0 : index
    %c0_82 = arith.constant 0 : index
    %290 = vector.load %arg6[%c0_80, %c0_81, %c0_82] : memref<1x16x256xf32, #tpu.memory_space<vmem>>, vector<1x16x256xf32>
    %291 = vector.shape_cast %290 : vector<1x16x256xf32> to vector<16x256xf32>
    %292 = vector.shape_cast %289 : vector<16x256xf32> to vector<1x16x256xf32>
    tpu.vector_store %arg6[%c0_80, %c0_81, %c0_82], %292 {strides = array<i32>} : memref<1x16x256xf32, #tpu.memory_space<vmem>>, vector<1x16x256xf32>,
    return
  }
  func.func @transform_0(%arg0: i32) -> (i32, i32, i32) {
    %c0_i32 = arith.constant 0 : i32
    %c0_i32_0 = arith.constant 0 : i32
    %c0_i32_1 = arith.constant 0 : i32
    return %arg0, %c0_i32, %c0_i32_0 : i32, i32, i32
  }
  func.func @transform_1(%arg0: i32) -> (i32, i32) {
    %c0_i32 = arith.constant 0 : i32
    %c0_i32_0 = arith.constant 0 : i32
    %c0_i32_1 = arith.constant 0 : i32
    return %c0_i32, %c0_i32_0 : i32, i32
  }
  func.func @transform_2(%arg0: i32) -> (i32, i32) {
    %c0_i32 = arith.constant 0 : i32
    %c0_i32_0 = arith.constant 0 : i32
    %c0_i32_1 = arith.constant 0 : i32
    return %c0_i32, %c0_i32_0 : i32, i32
  }
  func.func @transform_3(%arg0: i32) -> (i32, i32) {
    %c0_i32 = arith.constant 0 : i32
    %c0_i32_0 = arith.constant 0 : i32
    %c0_i32_1 = arith.constant 0 : i32
    return %c0_i32, %c0_i32_0 : i32, i32
  }
  func.func @transform_4(%arg0: i32) -> (i32, i32) {
    %c0_i32 = arith.constant 0 : i32
    %c0_i32_0 = arith.constant 0 : i32
    %c0_i32_1 = arith.constant 0 : i32
    return %c0_i32, %c0_i32_0 : i32, i32
  }
  func.func @transform_5(%arg0: i32) -> (i32, i32, i32) {
    %c0_i32 = arith.constant 0 : i32
    %c0_i32_0 = arith.constant 0 : i32
    %c0_i32_1 = arith.constant 0 : i32
    return %arg0, %c0_i32, %c0_i32_0 : i32, i32, i32
  }
}

</mosaic_0001>

<llo_original>
// kernel: mrf_forward.1
$region0: #{mrf_forward.1}
  #allocation0 [shape = 'u32[]', space=smem, size = 0x4, offset = 0x4, fixed_abs, tag = 'smem constant byte address 0x4 - core index']
  #allocation1 [shape = 'u32[144,128]{1,0:T(1,128)}', space=vmem, size = 0x12000, scoped, tag = 'internal scratch']
  %s0 = inlined_call_operand.vmem [shape: bf16[2,16,256], index: 0, kind: input, shape index: {}]
  %s1 = inlined_call_operand.vmem [shape: bf16[24,16], index: 1, kind: input, shape index: {}]
  %s2 = inlined_call_operand.vmem [shape: bf16[12,216], index: 2, kind: input, shape index: {}]
  %s3 = inlined_call_operand.vmem [shape: bf16[16,12], index: 3, kind: input, shape index: {}]
  %s4 = inlined_call_operand.vmem [shape: f32[52,1], index: 4, kind: input, shape index: {}]
  %s5 = inlined_call_operand.vmem [shape: f32[2,16,256], index: 5, kind: output, shape index: {}]
  %s6 = sld [smem:[#allocation0]]
  $region53: #{mrf_forward.1} parent=0
    _
  %s8 = ssub.s32 1, %s6
  %s9 = scalar_select 0, %s8, %s6
  loop: start=0, step=1, limit=4
  $region2: #{mrf_forward.1} parent=0 // loop_pre_header
    _
  $region3: #{mrf_forward.1} parent=0 // loop_header
    %s11 = sphi 0, %s15
    %p12 = scmp.ge.s32.totalorder %s11, 4
    %s21 = sphi 0, %s23
    %s24 = sphi 0, %s21
    %s25 = sphi 0, %s24
    %s41 = sphi 0, %s25
    %s45 = sphi 0, %s45
    %s47 = sphi 0, %s45
    %s48 = sphi 0, %s47
    %s62 = sphi 0, %s48
    %s66 = sphi 0, %s66
    %s68 = sphi 0, %s66
    %s69 = sphi 0, %s68
    %s83 = sphi 0, %s69
    %s87 = sphi 0, %s87
    %s89 = sphi 0, %s87
    %s90 = sphi 0, %s89
    %s104 = sphi 0, %s90
    %s108 = sphi 0, %s108
    %s110 = sphi 0, %s108
    %s111 = sphi 0, %s110
    %s125 = sphi 0, %s111
    %s131 = sphi 0, %s133
    %s134 = sphi 0, %s131
    %s135 = sphi 0, %s134
    %s151 = sphi 0, %s135
  $region4: #{mrf_forward.1} parent=0 // loop_header_branch
    %14 = sbr.rel (%p12) target = $region8
  $region5: #{mrf_forward.1} parent=0 // loop_body
    %s16 = ssub.s32 %s11, 1
    %s17 = ssub.s32 %s11, 2
    %s18 = sadd.s32 %s11, 1
    %s19 = ssub.s32 %s11, %s18
    %p20 = scmp.eq.s32.totalorder %s19, 0
    %s22 = sadd.s32 %s21, 1
    %s23 = scalar_select %p20, %s21, %s22
    %p26 = pneg %p20
    %p27 = scmp.eq.s32.totalorder %s11, 1
    %p28 = por %p26, %p27
    %p29 = scmp.ne.s32.totalorder %s21, %s24
    %p30 = scmp.eq.s32.totalorder %s11, 0
    %p31 = por %p29, %p30
    %p32 = scmp.ne.s32.totalorder %s21, %s24
    %p33 = scmp.eq.s32.totalorder %s16, 1
    %p34 = por %p32, %p33
    %p35 = scmp.ne.s32.totalorder %s24, %s25
    %p36 = scmp.eq.s32.totalorder %s16, 0
    %p37 = por %p35, %p36
    %p38 = scmp.ne.s32.totalorder %s24, %s25
    %p39 = scmp.eq.s32.totalorder %s17, 1
    %p40 = por %p38, %p39
    %p42 = scmp.ne.s32.totalorder %s25, %s41
    %p43 = scmp.eq.s32.totalorder %s17, 0
    %p44 = por %p42, %p43
    %s46 = sadd.s32 %s45, 1
    %p49 = scmp.eq.s32.totalorder %s11, 1
    %p50 = scmp.ne.s32.totalorder %s45, %s47
    %p51 = scmp.eq.s32.totalorder %s11, 0
    %p52 = por %p50, %p51
    %p53 = scmp.ne.s32.totalorder %s45, %s47
    %p54 = scmp.eq.s32.totalorder %s16, 1
    %p55 = por %p53, %p54
    %p56 = scmp.ne.s32.totalorder %s47, %s48
    %p57 = scmp.eq.s32.totalorder %s16, 0
    %p58 = por %p56, %p57
    %p59 = scmp.ne.s32.totalorder %s47, %s48
    %p60 = scmp.eq.s32.totalorder %s17, 1
    %p61 = por %p59, %p60
    %p63 = scmp.ne.s32.totalorder %s48, %s62
    %p64 = scmp.eq.s32.totalorder %s17, 0
    %p65 = por %p63, %p64
    %s67 = sadd.s32 %s66, 1
    %p70 = scmp.eq.s32.totalorder %s11, 1
    %p71 = scmp.ne.s32.totalorder %s66, %s68
    %p72 = scmp.eq.s32.totalorder %s11, 0
    %p73 = por %p71, %p72
    %p74 = scmp.ne.s32.totalorder %s66, %s68
    %p75 = scmp.eq.s32.totalorder %s16, 1
    %p76 = por %p74, %p75
    %p77 = scmp.ne.s32.totalorder %s68, %s69
    %p78 = scmp.eq.s32.totalorder %s16, 0
    %p79 = por %p77, %p78
    %p80 = scmp.ne.s32.totalorder %s68, %s69
    %p81 = scmp.eq.s32.totalorder %s17, 1
    %p82 = por %p80, %p81
    %p84 = scmp.ne.s32.totalorder %s69, %s83
    %p85 = scmp.eq.s32.totalorder %s17, 0
    %p86 = por %p84, %p85
    %s88 = sadd.s32 %s87, 1
    %p91 = scmp.eq.s32.totalorder %s11, 1
    %p92 = scmp.ne.s32.totalorder %s87, %s89
    %p93 = scmp.eq.s32.totalorder %s11, 0
    %p94 = por %p92, %p93
    %p95 = scmp.ne.s32.totalorder %s87, %s89
    %p96 = scmp.eq.s32.totalorder %s16, 1
    %p97 = por %p95, %p96
    %p98 = scmp.ne.s32.totalorder %s89, %s90
    %p99 = scmp.eq.s32.totalorder %s16, 0
    %p100 = por %p98, %p99
    %p101 = scmp.ne.s32.totalorder %s89, %s90
    %p102 = scmp.eq.s32.totalorder %s17, 1
    %p103 = por %p101, %p102
    %p105 = scmp.ne.s32.totalorder %s90, %s104
    %p106 = scmp.eq.s32.totalorder %s17, 0
    %p107 = por %p105, %p106
    %s109 = sadd.s32 %s108, 1
    %p112 = scmp.eq.s32.totalorder %s11, 1
    %p113 = scmp.ne.s32.totalorder %s108, %s110
    %p114 = scmp.eq.s32.totalorder %s11, 0
    %p115 = por %p113, %p114
    %p116 = scmp.ne.s32.totalorder %s108, %s110
    %p117 = scmp.eq.s32.totalorder %s16, 1
    %p118 = por %p116, %p117
    %p119 = scmp.ne.s32.totalorder %s110, %s111
    %p120 = scmp.eq.s32.totalorder %s16, 0
    %p121 = por %p119, %p120
    %p122 = scmp.ne.s32.totalorder %s110, %s111
    %p123 = scmp.eq.s32.totalorder %s17, 1
    %p124 = por %p122, %p123
    %p126 = scmp.ne.s32.totalorder %s111, %s125
    %p127 = scmp.eq.s32.totalorder %s17, 0
    %p128 = por %p126, %p127
    %s129 = ssub.s32 %s11, %s18
    %p130 = scmp.eq.s32.totalorder %s129, 0
    %s132 = sadd.s32 %s131, 1
    %s133 = scalar_select %p130, %s131, %s132
    %p136 = pneg %p130
    %p137 = scmp.eq.s32.totalorder %s11, 1
    %p138 = por %p136, %p137
    %p139 = scmp.ne.s32.totalorder %s131, %s134
    %p140 = scmp.eq.s32.totalorder %s11, 0
    %p141 = por %p139, %p140
    %p142 = scmp.ne.s32.totalorder %s131, %s134
    %p143 = scmp.eq.s32.totalorder %s16, 1
    %p144 = por %p142, %p143
    %p145 = scmp.ne.s32.totalorder %s134, %s135
    %p146 = scmp.eq.s32.totalorder %s16, 0
    %p147 = por %p145, %p146
    %p148 = scmp.ne.s32.totalorder %s134, %s135
    %p149 = scmp.eq.s32.totalorder %s17, 1
    %p150 = por %p148, %p149
    %p152 = scmp.ne.s32.totalorder %s135, %s151
    %p153 = scmp.eq.s32.totalorder %s17, 0
    %p154 = por %p152, %p153
    %p155 = scmp.le.s32.totalorder 1, %s11
    %p156 = scmp.lt.s32.totalorder %s11, 3
    %p157 = pnand %p155, %p156
    %p158 = pneg %p157
    // Predicated region
    $region9: #{mrf_forward.1} parent=5 // pred_check
      _
    $region10: #{mrf_forward.1} parent=5 // pred_check_branch
      %160 = sbr.rel (%p157) target = $region12
    $region11: #{mrf_forward.1} parent=5 // pred_region
      %s161 = ssub.s32 %s11, 1
      // Predicated region
      $region13: #{mrf_forward.1} parent=11 // pred_check
        %p162 = pneg %p58
      $region14: #{mrf_forward.1} parent=11 // pred_check_branch
        %164 = sbr.rel (%p162) target = $region16
      $region15: #{mrf_forward.1} parent=11 // pred_region
        _
      $region16: #{mrf_forward.1} parent=11 // pred_fallthru
        _
      // Predicated region
      $region17: #{mrf_forward.1} parent=11 // pred_check
        %p165 = pneg %p79
      $region18: #{mrf_forward.1} parent=11 // pred_check_branch
        %167 = sbr.rel (%p165) target = $region20
      $region19: #{mrf_forward.1} parent=11 // pred_region
        _
      $region20: #{mrf_forward.1} parent=11 // pred_fallthru
        _
      // Predicated region
      $region21: #{mrf_forward.1} parent=11 // pred_check
        %p168 = pneg %p100
      $region22: #{mrf_forward.1} parent=11 // pred_check_branch
        %170 = sbr.rel (%p168) target = $region24
      $region23: #{mrf_forward.1} parent=11 // pred_region
        _
      $region24: #{mrf_forward.1} parent=11 // pred_fallthru
        _
      // Predicated region
      $region25: #{mrf_forward.1} parent=11 // pred_check
        %p171 = pneg %p121
      $region26: #{mrf_forward.1} parent=11 // pred_check_branch
        %173 = sbr.rel (%p171) target = $region28
      $region27: #{mrf_forward.1} parent=11 // pred_region
        _
      $region28: #{mrf_forward.1} parent=11 // pred_fallthru
        _
    $region12: #{mrf_forward.1} parent=5 // pred_fallthru
      _
    %p174 = scmp.lt.s32.totalorder %s11, 2
    // Predicated region
    $region29: #{mrf_forward.1} parent=5 // pred_check
      %p175 = pneg %p174
    $region30: #{mrf_forward.1} parent=5 // pred_check_branch
      %177 = sbr.rel (%p175) target = $region32
    $region31: #{mrf_forward.1} parent=5 // pred_region
      // Predicated region
      $region33: #{mrf_forward.1} parent=31 // pred_check
        %p178 = pneg %p31
      $region34: #{mrf_forward.1} parent=31 // pred_check_branch
        %180 = sbr.rel (%p178) target = $region36
      $region35: #{mrf_forward.1} parent=31 // pred_region
        %p181 = scmp.lt.s32.totalorder %s11, 1
        %s182 = scalar_select %p181, %s11, 1
        %s183 = smul.addr %s182, 4
        %s184 = smul.addr %s183, 4
        %s185 = scalar_lea.vmem %s0, %s184
      $region36: #{mrf_forward.1} parent=31 // pred_fallthru
        _
    $region32: #{mrf_forward.1} parent=5 // pred_fallthru
      _
    %p186 = scmp.le.s32.totalorder 1, %s11
    %p187 = scmp.lt.s32.totalorder %s11, 3
    %p188 = pnand %p186, %p187
    %p189 = pneg %p188
    // Predicated region
    $region37: #{mrf_forward.1} parent=5 // pred_check
      _
    $region38: #{mrf_forward.1} parent=5 // pred_check_branch
      %191 = sbr.rel (%p188) target = $region40
    $region39: #{mrf_forward.1} parent=5 // pred_region
      %s192 = ssub.s32 %s11, 1
      %p193 = scmp.lt.s32.totalorder %s16, 1
      %s194 = scalar_select %p193, %s16, 1
      %s195 = smul.addr %s194, 4
      %s196 = smul.addr %s195, 4
      %s197 = scalar_lea.vmem %s0, %s196
      %p198 = pneg %p37
      %p199 = pneg %p34
      %p200 = pneg %p58
      %p201 = pneg %p55
      %p202 = pneg %p79
      %p203 = pneg %p76
      %p204 = pneg %p100
      %p205 = pneg %p97
      %p206 = pneg %p121
      %p207 = pneg %p118
      %p208 = pneg %p147
      %p209 = pneg %p144
      %p210 = scmp.lt.s32.totalorder %s16, 1
      %s211 = scalar_select %p210, %s16, 1
      %s212 = smul.addr %s211, 4
      %s213 = smul.addr %s212, 8
      %s214 = scalar_lea.vmem %s5, %s213
      %p215 = scmp.lt.s32.totalorder %s16, 1
      %s216 = scalar_select %p215, %s16, 1
      %s217 = smul.addr %s216, 4
      %s218 = smul.addr %s217, 4
      %s219 = scalar_lea.vmem %s0, %s218
      %p220 = scmp.lt.s32.totalorder %s16, 1
      %s221 = scalar_select %p220, %s16, 1
      %s222 = smul.addr %s221, 4
      %s223 = smul.addr %s222, 8
      %s224 = scalar_lea.vmem %s5, %s223
      %v226 = vld [vmem:[%s4] sm:$0xff]
      %v227 = vld [vmem:[%s4 + $0x8] sm:$0xff]
      %v228 = vld [vmem:[%s4 + $0x10] sm:$0xff]
      %v229 = vld [vmem:[%s4 + $0x18] sm:$0xff]
      %v230 = vld [vmem:[%s4 + $0x20] sm:$0xff]
      %v231 = vld [vmem:[%s4 + $0x28] sm:$0xff]
      %v232 = vld [vmem:[%s4 + $0x30] sm:$0xf]
      %v233 = vld [vmem:[%s219] sm:$0xff]
      %v234 = vld [vmem:[%s219 + $0x8] sm:$0xff]
      %v235 = vld [vmem:[%s1] sm:$0xf]
      %v236 = vld [vmem:[%s1 + $0x4] sm:$0xf]
      %v237 = vld [vmem:[%s1 + $0x8] sm:$0xf]
      %239 = vset.pattern.permute.xlu0 0
      %240 = vperm.xlu0 %239, %v226
      %v241 = vpop.permute.xlu0 %240
      %244 = vset.pattern.permute.xlu0 0
      %245 = vperm.xlu0 %244, %v227
      %v246 = vpop.permute.xlu0 %245
      %249 = vset.pattern.permute.xlu0 0
      %250 = vperm.xlu0 %249, %v228
      %v251 = vpop.permute.xlu0 %250
      %v256 = vunpack.c.l.b16 %v235
      %v257 = vunpack.c.l.b16 %v236
      %v258 = vunpack.c.l.b16 %v237
      %v259 = vpack.c.b16 %v257, %v256
      %v260 = vpack.c.b16 %v258, %v258
      %v263 = vunpack.c.l.b16 %v233
      %v264 = vunpack.c.h.b16 %v233
      %v265 = vunpack.c.l.b16 %v234
      %v266 = vunpack.c.h.b16 %v234
      %v267 = vpack.c.b16 %v265, %v263
      %v268 = vpack.c.b16 %v266, %v264
      %vm271 = vcmask 130048
      %v273 = vsel %vm271, %v259, 0
      %v276 = vsel %vm271, %v260, 0
      %278 = vmatprep.subr.bf16.mxu0 %v268
      %279 = vmatpush1.bf16.msra.mxu0 %v267
      %280 = vmatprep.subr.bf16.mxu0 0
      %281 = vmatpush1.bf16.msra.mxu0 0
      %282 = vmatprep.subr.bf16.mxu0 0
      %283 = vmatpush1.bf16.msra.mxu0 0
      %284 = vmatprep.subr.bf16.mxu0 0
      %285 = vmatpush1.bf16.msra.mxu0 0
      %286 = vmatprep.subr.bf16.mxu0 0
      %287 = vmatpush1.bf16.msra.mxu0 0
      %288 = vmatprep.subr.bf16.mxu0 0
      %289 = vmatpush1.bf16.msra.mxu0 0
      %290 = vmatprep.subr.bf16.mxu0 0
      %291 = vmatpush1.bf16.msra.mxu0 0
      %292 = vmatprep.subr.bf16.mxu0 0
      %293 = vmatpush1.bf16.msra.mxu0 0
      %294 = vmatprep.subr.bf16.mxu0 0
      %295 = vmatpush1.bf16.msra.mxu0 0
      %296 = vmatprep.subr.bf16.mxu0 0
      %297 = vmatpush1.bf16.msra.mxu0 0
      %298 = vmatprep.subr.bf16.mxu0 0
      %299 = vmatpush1.bf16.msra.mxu0 0
      %300 = vmatprep.subr.bf16.mxu0 0
      %301 = vmatpush1.bf16.msra.mxu0 0
      %302 = vmatprep.subr.bf16.mxu0 0
      %303 = vmatpush1.bf16.msra.mxu0 0
      %304 = vmatprep.subr.bf16.mxu0 0
      %305 = vmatpush1.bf16.msra.mxu0 0
      %306 = vmatprep.subr.bf16.mxu0 0
      %307 = vmatpush1.bf16.msra.mxu0 0
      %308 = vmatprep.subr.bf16.mxu0 0
      %309 = vmatpush1.bf16.msra.mxu0 0
      %310 = vmatprep.mubr.bf16.mxu0 0
      %311 = vmatmul.mubr.bf16.gmra.mrb[0].mxu0 %v273
      %v312 = vpop.f32.mrb[0].mxu0
      %v313 = vadd.f32 %v241, %v312
      %v314 = vpop.f32.mrb[0].mxu0
      %v315 = vadd.f32 %v241, %v314
      %v316 = vpop.f32.mrb[0].mxu0
      %v317 = vadd.f32 %v246, %v316
      %v318 = vpop.f32.mrb[0].mxu0
      %v319 = vadd.f32 %v246, %v318
      %320 = vmatprep.mubr.bf16.mxu0 0
      %321 = vmatmul.mubr.bf16.gmra.mrb[0].mxu0 %v276
      %v322 = vpop.f32.mrb[0].mxu0
      %v323 = vadd.f32 %v251, %v322
      %v324 = vpop.f32.mrb[0].mxu0
      %v325 = vadd.f32 %v251, %v324
      %v326 = vpop.f32.mrb[0].mxu0
      %v327 = vpop.f32.mrb[0].mxu0
      %328 = vdwg.mxu0
      %v329 = vmax.f32 %v313, 0.0
      %v330 = vmax.f32 %v315, 0.0
      %v331 = vmax.f32 %v317, 0.0
      %v332 = vmax.f32 %v319, 0.0
      %v333 = vmax.f32 %v323, 0.0
      %v334 = vmax.f32 %v325, 0.0
      %v335 = vlaneseq
      %v336 = vand.u32 %v335, 127
      %v337 = vadd.s32 %v336, 128
      %v338 = vand.u32 %v336, 15
      %v339 = vand.u32 %v337, 15
      %vm340 = vcmp.ge.s32.totalorder %v336, 64
      %vm341 = vcmp.ge.s32.totalorder %v337, 64
      %vm342 = vcmp.lt.s32.totalorder %v336, 256
      %vm343 = vcmp.lt.s32.totalorder %v337, 256
      %vm344 = vmand %vm340, %vm342
      %vm345 = vmand %vm341, %vm343
      %vm346 = vcmp.ge.s32.totalorder %v336, 32
      %vm347 = vcmp.ge.s32.totalorder %v337, 32
      %vm348 = vmand %vm346, %vm342
      %vm349 = vmand %vm347, %vm343
      %vm350 = vcmp.ge.s32.totalorder %v336, 16
      %vm351 = vcmp.ge.s32.totalorder %v337, 16
      %vm352 = vmand %vm350, %vm342
      %vm353 = vmand %vm351, %vm343
      %vm354 = vcmp.ge.s32.totalorder %v336, 0
      %vm355 = vcmp.ge.s32.totalorder %v337, 0
      %vm356 = vmand %vm354, %vm342
      %vm357 = vmand %vm355, %vm343
      %vm358 = vcmp.lt.s32.totalorder %v336, 240
      %vm359 = vcmp.lt.s32.totalorder %v337, 240
      %vm360 = vmand %vm354, %vm358
      %vm361 = vmand %vm355, %vm359
      %vm362 = vcmp.lt.s32.totalorder %v336, 224
      %vm363 = vcmp.lt.s32.totalorder %v337, 224
      %vm364 = vmand %vm354, %vm362
      %vm365 = vmand %vm355, %vm363
      %vm366 = vcmp.lt.s32.totalorder %v336, 192
      %vm367 = vcmp.lt.s32.totalorder %v337, 192
      %vm368 = vmand %vm354, %vm366
      %vm369 = vmand %vm355, %vm367
      %v370 = vadd.s32 %v338, 4294967292
      %v371 = vadd.s32 %v339, 4294967292
      %vm372 = vcmp.ge.s32.totalorder %v370, 0
      %vm373 = vcmp.ge.s32.totalorder %v371, 0
      %vm374 = vcmp.lt.s32.totalorder %v370, 16
      %vm375 = vcmp.lt.s32.totalorder %v371, 16
      %vm376 = vmand %vm372, %vm374
      %vm377 = vmand %vm373, %vm375
      %v378 = vadd.s32 %v338, 4294967294
      %v379 = vadd.s32 %v339, 4294967294
      %vm380 = vcmp.ge.s32.totalorder %v378, 0
      %vm381 = vcmp.ge.s32.totalorder %v379, 0
      %vm382 = vcmp.lt.s32.totalorder %v378, 16
      %vm383 = vcmp.lt.s32.totalorder %v379, 16
      %vm384 = vmand %vm380, %vm382
      %vm385 = vmand %vm381, %vm383
      %v386 = vadd.s32 %v338, 4294967295
      %v387 = vadd.s32 %v339, 4294967295
      %vm388 = vcmp.ge.s32.totalorder %v386, 0
      %vm389 = vcmp.ge.s32.totalorder %v387, 0
      %vm390 = vcmp.lt.s32.totalorder %v386, 16
      %vm391 = vcmp.lt.s32.totalorder %v387, 16
      %vm392 = vmand %vm388, %vm390
      %vm393 = vmand %vm389, %vm391
      %vm394 = vcmp.ge.s32.totalorder %v338, 0
      %vm395 = vcmp.ge.s32.totalorder %v339, 0
      %vm396 = vcmp.lt.s32.totalorder %v338, 16
      %vm397 = vcmp.lt.s32.totalorder %v339, 16
      %vm398 = vmand %vm394, %vm396
      %vm399 = vmand %vm395, %vm397
      %v400 = vadd.s32 %v338, 1
      %v401 = vadd.s32 %v339, 1
      %vm402 = vcmp.ge.s32.totalorder %v400, 0
      %vm403 = vcmp.ge.s32.totalorder %v401, 0
      %vm404 = vcmp.lt.s32.totalorder %v400, 16
      %vm405 = vcmp.lt.s32.totalorder %v401, 16
      %vm406 = vmand %vm402, %vm404
      %vm407 = vmand %vm403, %vm405
      %v408 = vadd.s32 %v338, 2
      %v409 = vadd.s32 %v339, 2
      %vm410 = vcmp.ge.s32.totalorder %v408, 0
      %vm411 = vcmp.ge.s32.totalorder %v409, 0
      %vm412 = vcmp.lt.s32.totalorder %v408, 16
      %vm413 = vcmp.lt.s32.totalorder %v409, 16
      %vm414 = vmand %vm410, %vm412
      %vm415 = vmand %vm411, %vm413
      %v416 = vadd.s32 %v338, 4
      %v417 = vadd.s32 %v339, 4
      %vm418 = vcmp.ge.s32.totalorder %v416, 0
      %vm419 = vcmp.ge.s32.totalorder %v417, 0
      %vm420 = vcmp.lt.s32.totalorder %v416, 16
      %vm421 = vcmp.lt.s32.totalorder %v417, 16
      %vm422 = vmand %vm418, %vm420
      %vm423 = vmand %vm419, %vm421
      %vm424 = vmand %vm352, %vm392
      %vm425 = vmand %vm353, %vm393
      %vm426 = vmand %vm352, %vm398
      %vm427 = vmand %vm353, %vm399
      %vm428 = vmand %vm352, %vm406
      %vm429 = vmand %vm353, %vm407
      %vm430 = vmand %vm356, %vm392
      %vm431 = vmand %vm357, %vm393
      %vm432 = vmand %vm356, %vm398
      %vm433 = vmand %vm357, %vm399
      %vm434 = vmand %vm356, %vm406
      %vm435 = vmand %vm357, %vm407
      %vm436 = vmand %vm360, %vm392
      %vm437 = vmand %vm361, %vm393
      %vm438 = vmand %vm360, %vm398
      %vm439 = vmand %vm361, %vm399
      %vm440 = vmand %vm360, %vm406
      %vm441 = vmand %vm361, %vm407
      %vm442 = vmand %vm348, %vm384
      %vm443 = vmand %vm349, %vm385
      %vm444 = vmand %vm348, %vm398
      %vm445 = vmand %vm349, %vm399
      %vm446 = vmand %vm348, %vm414
      %vm447 = vmand %vm349, %vm415
      %vm448 = vmand %vm356, %vm384
      %vm449 = vmand %vm357, %vm385
      %vm450 = vmand %vm356, %vm414
      %vm451 = vmand %vm357, %vm415
      %vm452 = vmand %vm364, %vm384
      %vm453 = vmand %vm365, %vm385
      %vm454 = vmand %vm364, %vm398
      %vm455 = vmand %vm365, %vm399
      %vm456 = vmand %vm364, %vm414
      %vm457 = vmand %vm365, %vm415
      %vm458 = vmand %vm344, %vm376
      %vm459 = vmand %vm345, %vm377
      %vm460 = vmand %vm344, %vm398
      %vm461 = vmand %vm345, %vm399
      %vm462 = vmand %vm344, %vm422
      %vm463 = vmand %vm345, %vm423
      %vm464 = vmand %vm356, %vm376
      %vm465 = vmand %vm357, %vm377
      %vm466 = vmand %vm356, %vm422
      %vm467 = vmand %vm357, %vm423
      %vm468 = vmand %vm368, %vm376
      %vm469 = vmand %vm369, %vm377
      %vm470 = vmand %vm368, %vm398
      %vm471 = vmand %vm369, %vm399
      %vm472 = vmand %vm368, %vm422
      %vm473 = vmand %vm369, %vm423
      %474 = vrot.lane.b32.xlu0 %v329, 17
      %v475 = vpop.permute.xlu0 %474
      %476 = vrot.lane.b32.xlu0 %v330, 17
      %v477 = vpop.permute.xlu0 %476
      %vm478 = vcmp.lt.s32.totalorder %v336, 17
      %v479 = vsel %vm478, %v475, %v477
      %v480 = vsel %vm478, %v477, %v475
      %v481 = vsel %vm424, 1, 0
      %v482 = vsel %vm425, 1, 0
      %vm483 = vcmp.eq.s32.totalorder %v481, 1
      %vm484 = vcmp.eq.s32.totalorder %v482, 1
      %v485 = vsel %vm483, %v480, 0.0
      %v486 = vsel %vm484, %v479, 0.0
      %487 = vrot.lane.b32.xlu0 %v329, 16
      %v488 = vpop.permute.xlu0 %487
      %489 = vrot.lane.b32.xlu0 %v330, 16
      %v490 = vpop.permute.xlu0 %489
      %vm491 = vcmp.lt.s32.totalorder %v336, 16
      %v492 = vsel %vm491, %v488, %v490
      %v493 = vsel %vm491, %v490, %v488
      %v494 = vsel %vm426, 1, 0
      %v495 = vsel %vm427, 1, 0
      %vm496 = vcmp.eq.s32.totalorder %v494, 1
      %vm497 = vcmp.eq.s32.totalorder %v495, 1
      %v498 = vsel %vm496, %v493, 0.0
      %v499 = vsel %vm497, %v492, 0.0
      %500 = vrot.lane.b32.xlu0 %v329, 15
      %v501 = vpop.permute.xlu0 %500
      %502 = vrot.lane.b32.xlu0 %v330, 15
      %v503 = vpop.permute.xlu0 %502
      %vm504 = vcmp.lt.s32.totalorder %v336, 15
      %v505 = vsel %vm504, %v501, %v503
      %v506 = vsel %vm504, %v503, %v501
      %v507 = vsel %vm428, 1, 0
      %v508 = vsel %vm429, 1, 0
      %vm509 = vcmp.eq.s32.totalorder %v507, 1
      %vm510 = vcmp.eq.s32.totalorder %v508, 1
      %v511 = vsel %vm509, %v506, 0.0
      %v512 = vsel %vm510, %v505, 0.0
      %513 = vrot.lane.b32.xlu0 %v329, 1
      %v514 = vpop.permute.xlu0 %513
      %515 = vrot.lane.b32.xlu0 %v330, 1
      %v516 = vpop.permute.xlu0 %515
      %vm517 = vcmp.lt.s32.totalorder %v336, 1
      %v518 = vsel %vm517, %v514, %v516
      %v519 = vsel %vm517, %v516, %v514
      %v520 = vsel %vm430, 1, 0
      %v521 = vsel %vm431, 1, 0
      %vm522 = vcmp.eq.s32.totalorder %v520, 1
      %vm523 = vcmp.eq.s32.totalorder %v521, 1
      %v524 = vsel %vm522, %v519, 0.0
      %v525 = vsel %vm523, %v518, 0.0
      %v526 = vsel %vm432, 1, 0
      %v527 = vsel %vm433, 1, 0
      %vm528 = vcmp.eq.s32.totalorder %v526, 1
      %vm529 = vcmp.eq.s32.totalorder %v527, 1
      %v530 = vsel %vm528, %v329, 0.0
      %v531 = vsel %vm529, %v330, 0.0
      %532 = vrot.lane.b32.xlu0 %v329, 127
      %v533 = vpop.permute.xlu0 %532
      %534 = vrot.lane.b32.xlu0 %v330, 127
      %v535 = vpop.permute.xlu0 %534
      %vm536 = vcmp.lt.s32.totalorder %v336, 127
      %v537 = vsel %vm536, %v533, %v535
      %v538 = vsel %vm536, %v535, %v533
      %v539 = vsel %vm434, 1, 0
      %v540 = vsel %vm435, 1, 0
      %vm541 = vcmp.eq.s32.totalorder %v539, 1
      %vm542 = vcmp.eq.s32.totalorder %v540, 1
      %v543 = vsel %vm541, %v537, 0.0
      %v544 = vsel %vm542, %v538, 0.0
      %545 = vrot.lane.b32.xlu0 %v329, 113
      %v546 = vpop.permute.xlu0 %545
      %547 = vrot.lane.b32.xlu0 %v330, 113
      %v548 = vpop.permute.xlu0 %547
      %vm549 = vcmp.lt.s32.totalorder %v336, 113
      %v550 = vsel %vm549, %v546, %v548
      %v551 = vsel %vm549, %v548, %v546
      %v552 = vsel %vm436, 1, 0
      %v553 = vsel %vm437, 1, 0
      %vm554 = vcmp.eq.s32.totalorder %v552, 1
      %vm555 = vcmp.eq.s32.totalorder %v553, 1
      %v556 = vsel %vm554, %v550, 0.0
      %v557 = vsel %vm555, %v551, 0.0
      %558 = vrot.lane.b32.xlu0 %v329, 112
      %v559 = vpop.permute.xlu0 %558
      %560 = vrot.lane.b32.xlu0 %v330, 112
      %v561 = vpop.permute.xlu0 %560
      %vm562 = vcmp.lt.s32.totalorder %v336, 112
      %v563 = vsel %vm562, %v559, %v561
      %v564 = vsel %vm562, %v561, %v559
      %v565 = vsel %vm438, 1, 0
      %v566 = vsel %vm439, 1, 0
      %vm567 = vcmp.eq.s32.totalorder %v565, 1
      %vm568 = vcmp.eq.s32.totalorder %v566, 1
      %v569 = vsel %vm567, %v563, 0.0
      %v570 = vsel %vm568, %v564, 0.0
      %571 = vrot.lane.b32.xlu0 %v329, 111
      %v572 = vpop.permute.xlu0 %571
      %573 = vrot.lane.b32.xlu0 %v330, 111
      %v574 = vpop.permute.xlu0 %573
      %vm575 = vcmp.lt.s32.totalorder %v336, 111
      %v576 = vsel %vm575, %v572, %v574
      %v577 = vsel %vm575, %v574, %v572
      %v578 = vsel %vm440, 1, 0
      %v579 = vsel %vm441, 1, 0
      %vm580 = vcmp.eq.s32.totalorder %v578, 1
      %vm581 = vcmp.eq.s32.totalorder %v579, 1
      %v582 = vsel %vm580, %v576, 0.0
      %v583 = vsel %vm581, %v577, 0.0
      %584 = vrot.lane.b32.xlu0 %v331, 34
      %v585 = vpop.permute.xlu0 %584
      %586 = vrot.lane.b32.xlu0 %v332, 34
      %v587 = vpop.permute.xlu0 %586
      %vm588 = vcmp.lt.s32.totalorder %v336, 34
      %v589 = vsel %vm588, %v585, %v587
      %v590 = vsel %vm588, %v587, %v585
      %v591 = vsel %vm442, 1, 0
      %v592 = vsel %vm443, 1, 0
      %vm593 = vcmp.eq.s32.totalorder %v591, 1
      %vm594 = vcmp.eq.s32.totalorder %v592, 1
      %v595 = vsel %vm593, %v590, 0.0
      %v596 = vsel %vm594, %v589, 0.0
      %597 = vrot.lane.b32.xlu0 %v331, 32
      %v598 = vpop.permute.xlu0 %597
      %599 = vrot.lane.b32.xlu0 %v332, 32
      %v600 = vpop.permute.xlu0 %599
      %vm601 = vcmp.lt.s32.totalorder %v336, 32
      %v602 = vsel %vm601, %v598, %v600
      %v603 = vsel %vm601, %v600, %v598
      %v604 = vsel %vm444, 1, 0
      %v605 = vsel %vm445, 1, 0
      %vm606 = vcmp.eq.s32.totalorder %v604, 1
      %vm607 = vcmp.eq.s32.totalorder %v605, 1
      %v608 = vsel %vm606, %v603, 0.0
      %v609 = vsel %vm607, %v602, 0.0
      %610 = vrot.lane.b32.xlu0 %v331, 30
      %v611 = vpop.permute.xlu0 %610
      %612 = vrot.lane.b32.xlu0 %v332, 30
      %v613 = vpop.permute.xlu0 %612
      %vm614 = vcmp.lt.s32.totalorder %v336, 30
      %v615 = vsel %vm614, %v611, %v613
      %v616 = vsel %vm614, %v613, %v611
      %v617 = vsel %vm446, 1, 0
      %v618 = vsel %vm447, 1, 0
      %vm619 = vcmp.eq.s32.totalorder %v617, 1
      %vm620 = vcmp.eq.s32.totalorder %v618, 1
      %v621 = vsel %vm619, %v616, 0.0
      %v622 = vsel %vm620, %v615, 0.0
      %623 = vrot.lane.b32.xlu0 %v331, 2
      %v624 = vpop.permute.xlu0 %623
      %625 = vrot.lane.b32.xlu0 %v332, 2
      %v626 = vpop.permute.xlu0 %625
      %vm627 = vcmp.lt.s32.totalorder %v336, 2
      %v628 = vsel %vm627, %v624, %v626
      %v629 = vsel %vm627, %v626, %v624
      %v630 = vsel %vm448, 1, 0
      %v631 = vsel %vm449, 1, 0
      %vm632 = vcmp.eq.s32.totalorder %v630, 1
      %vm633 = vcmp.eq.s32.totalorder %v631, 1
      %v634 = vsel %vm632, %v629, 0.0
      %v635 = vsel %vm633, %v628, 0.0
      %v636 = vsel %vm528, %v331, 0.0
      %v637 = vsel %vm529, %v332, 0.0
      %638 = vrot.lane.b32.xlu0 %v331, 126
      %v639 = vpop.permute.xlu0 %638
      %640 = vrot.lane.b32.xlu0 %v332, 126
      %v641 = vpop.permute.xlu0 %640
      %vm642 = vcmp.lt.s32.totalorder %v336, 126
      %v643 = vsel %vm642, %v639, %v641
      %v644 = vsel %vm642, %v641, %v639
      %v645 = vsel %vm450, 1, 0
      %v646 = vsel %vm451, 1, 0
      %vm647 = vcmp.eq.s32.totalorder %v645, 1
      %vm648 = vcmp.eq.s32.totalorder %v646, 1
      %v649 = vsel %vm647, %v643, 0.0
      %v650 = vsel %vm648, %v644, 0.0
      %651 = vrot.lane.b32.xlu0 %v331, 98
      %v652 = vpop.permute.xlu0 %651
      %653 = vrot.lane.b32.xlu0 %v332, 98
      %v654 = vpop.permute.xlu0 %653
      %vm655 = vcmp.lt.s32.totalorder %v336, 98
      %v656 = vsel %vm655, %v652, %v654
      %v657 = vsel %vm655, %v654, %v652
      %v658 = vsel %vm452, 1, 0
      %v659 = vsel %vm453, 1, 0
      %vm660 = vcmp.eq.s32.totalorder %v658, 1
      %vm661 = vcmp.eq.s32.totalorder %v659, 1
      %v662 = vsel %vm660, %v656, 0.0
      %v663 = vsel %vm661, %v657, 0.0
      %664 = vrot.lane.b32.xlu0 %v331, 96
      %v665 = vpop.permute.xlu0 %664
      %666 = vrot.lane.b32.xlu0 %v332, 96
      %v667 = vpop.permute.xlu0 %666
      %vm668 = vcmp.lt.s32.totalorder %v336, 96
      %v669 = vsel %vm668, %v665, %v667
      %v670 = vsel %vm668, %v667, %v665
      %v671 = vsel %vm454, 1, 0
      %v672 = vsel %vm455, 1, 0
      %vm673 = vcmp.eq.s32.totalorder %v671, 1
      %vm674 = vcmp.eq.s32.totalorder %v672, 1
      %v675 = vsel %vm673, %v669, 0.0
      %v676 = vsel %vm674, %v670, 0.0
      %677 = vrot.lane.b32.xlu0 %v331, 94
      %v678 = vpop.permute.xlu0 %677
      %679 = vrot.lane.b32.xlu0 %v332, 94
      %v680 = vpop.permute.xlu0 %679
      %vm681 = vcmp.lt.s32.totalorder %v336, 94
      %v682 = vsel %vm681, %v678, %v680
      %v683 = vsel %vm681, %v680, %v678
      %v684 = vsel %vm456, 1, 0
      %v685 = vsel %vm457, 1, 0
      %vm686 = vcmp.eq.s32.totalorder %v684, 1
      %vm687 = vcmp.eq.s32.totalorder %v685, 1
      %v688 = vsel %vm686, %v682, 0.0
      %v689 = vsel %vm687, %v683, 0.0
      %690 = vrot.lane.b32.xlu0 %v333, 68
      %v691 = vpop.permute.xlu0 %690
      %692 = vrot.lane.b32.xlu0 %v334, 68
      %v693 = vpop.permute.xlu0 %692
      %vm694 = vcmp.lt.s32.totalorder %v336, 68
      %v695 = vsel %vm694, %v691, %v693
      %v696 = vsel %vm694, %v693, %v691
      %v697 = vsel %vm458, 1, 0
      %v698 = vsel %vm459, 1, 0
      %vm699 = vcmp.eq.s32.totalorder %v697, 1
      %vm700 = vcmp.eq.s32.totalorder %v698, 1
      %v701 = vsel %vm699, %v696, 0.0
      %v702 = vsel %vm700, %v695, 0.0
      %703 = vrot.lane.b32.xlu0 %v333, 64
      %v704 = vpop.permute.xlu0 %703
      %705 = vrot.lane.b32.xlu0 %v334, 64
      %v706 = vpop.permute.xlu0 %705
      %vm707 = vcmp.lt.s32.totalorder %v336, 64
      %v708 = vsel %vm707, %v704, %v706
      %v709 = vsel %vm707, %v706, %v704
      %v710 = vsel %vm460, 1, 0
      %v711 = vsel %vm461, 1, 0
      %vm712 = vcmp.eq.s32.totalorder %v710, 1
      %vm713 = vcmp.eq.s32.totalorder %v711, 1
      %v714 = vsel %vm712, %v709, 0.0
      %v715 = vsel %vm713, %v708, 0.0
      %716 = vrot.lane.b32.xlu0 %v333, 60
      %v717 = vpop.permute.xlu0 %716
      %718 = vrot.lane.b32.xlu0 %v334, 60
      %v719 = vpop.permute.xlu0 %718
      %vm720 = vcmp.lt.s32.totalorder %v336, 60
      %v721 = vsel %vm720, %v717, %v719
      %v722 = vsel %vm720, %v719, %v717
      %v723 = vsel %vm462, 1, 0
      %v724 = vsel %vm463, 1, 0
      %vm725 = vcmp.eq.s32.totalorder %v723, 1
      %vm726 = vcmp.eq.s32.totalorder %v724, 1
      %v727 = vsel %vm725, %v722, 0.0
      %v728 = vsel %vm726, %v721, 0.0
      %729 = vrot.lane.b32.xlu0 %v333, 4
      %v730 = vpop.permute.xlu0 %729
      %731 = vrot.lane.b32.xlu0 %v334, 4
      %v732 = vpop.permute.xlu0 %731
      %vm733 = vcmp.lt.s32.totalorder %v336, 4
      %v734 = vsel %vm733, %v730, %v732
      %v735 = vsel %vm733, %v732, %v730
      %v736 = vsel %vm464, 1, 0
      %v737 = vsel %vm465, 1, 0
      %vm738 = vcmp.eq.s32.totalorder %v736, 1
      %vm739 = vcmp.eq.s32.totalorder %v737, 1
      %v740 = vsel %vm738, %v735, 0.0
      %v741 = vsel %vm739, %v734, 0.0
      %v742 = vsel %vm528, %v333, 0.0
      %v743 = vsel %vm529, %v334, 0.0
      %744 = vrot.lane.b32.xlu0 %v333, 124
      %v745 = vpop.permute.xlu0 %744
      %746 = vrot.lane.b32.xlu0 %v334, 124
      %v747 = vpop.permute.xlu0 %746
      %vm748 = vcmp.lt.s32.totalorder %v336, 124
      %v749 = vsel %vm748, %v745, %v747
      %v750 = vsel %vm748, %v747, %v745
      %v751 = vsel %vm466, 1, 0
      %v752 = vsel %vm467, 1, 0
      %vm753 = vcmp.eq.s32.totalorder %v751, 1
      %vm754 = vcmp.eq.s32.totalorder %v752, 1
      %v755 = vsel %vm753, %v749, 0.0
      %v756 = vsel %vm754, %v750, 0.0
      %v757 = vsel %vm468, 1, 0
      %v758 = vsel %vm469, 1, 0
      %vm759 = vcmp.eq.s32.totalorder %v757, 1
      %vm760 = vcmp.eq.s32.totalorder %v758, 1
      %v761 = vsel %vm759, %v695, 0.0
      %v762 = vsel %vm760, %v696, 0.0
      %v763 = vsel %vm470, 1, 0
      %v764 = vsel %vm471, 1, 0
      %vm765 = vcmp.eq.s32.totalorder %v763, 1
      %vm766 = vcmp.eq.s32.totalorder %v764, 1
      %v767 = vsel %vm765, %v708, 0.0
      %v768 = vsel %vm766, %v709, 0.0
      %v769 = vsel %vm472, 1, 0
      %v770 = vsel %vm473, 1, 0
      %vm771 = vcmp.eq.s32.totalorder %v769, 1
      %vm772 = vcmp.eq.s32.totalorder %v770, 1
      %v773 = vsel %vm771, %v721, 0.0
      %v774 = vsel %vm772, %v722, 0.0
      %v775 = vpack.c.bf16 %v498, %v485
      %v776 = vpack.c.bf16 %v499, %v486
      %v777 = vpack.c.bf16 %v524, %v511
      %v778 = vpack.c.bf16 %v525, %v512
      %v779 = vpack.c.bf16 %v543, %v530
      %v780 = vpack.c.bf16 %v544, %v531
      %v781 = vpack.c.bf16 %v569, %v556
      %v782 = vpack.c.bf16 %v570, %v557
      %v783 = vpack.c.bf16 %v595, %v582
      %v784 = vpack.c.bf16 %v596, %v583
      %v785 = vpack.c.bf16 %v621, %v608
      %v786 = vpack.c.bf16 %v622, %v609
      %v787 = vpack.c.bf16 %v636, %v634
      %v788 = vpack.c.bf16 %v637, %v635
      %v789 = vpack.c.bf16 %v662, %v649
      %v790 = vpack.c.bf16 %v663, %v650
      %v791 = vpack.c.bf16 %v688, %v675
      %v792 = vpack.c.bf16 %v689, %v676
      %v793 = vpack.c.bf16 %v714, %v701
      %v794 = vpack.c.bf16 %v715, %v702
      %v795 = vpack.c.bf16 %v740, %v727
      %v796 = vpack.c.bf16 %v741, %v728
      %v797 = vpack.c.bf16 %v755, %v742
      %v798 = vpack.c.bf16 %v756, %v743
      %v799 = vpack.c.bf16 %v767, %v761
      %v800 = vpack.c.bf16 %v768, %v762
      %v801 = vpack.c.bf16 %v773, %v773
      %v802 = vpack.c.bf16 %v774, %v774
      %v803 = vld [vmem:[%s2] sm:$0xff]
      %v804 = vld [vmem:[%s2 + $0x8] sm:$0x33]
      %806 = vset.pattern.permute.xlu0 0
      %807 = vperm.xlu0 %806, %v229
      %v808 = vpop.permute.xlu0 %807
      %811 = vset.pattern.permute.xlu0 0
      %812 = vperm.xlu0 %811, %v230
      %v813 = vpop.permute.xlu0 %812
      %v817 = vunpack.c.l.b16 %v803
      %v818 = vunpack.c.h.b16 %v803
      %v819 = vunpack.c.l.b16 %v804
      %v820 = vunpack.c.h.b16 %v804
      %v821 = vpack.c.b16 %v819, %v817
      %v822 = vpack.c.b16 %v820, %v818
      %vm824 = vcmask 719872
      %v826 = vsel %vm824, %v822, 0
      %vm828 = vcmask 1043456
      %v830 = vsel %vm828, %v801, 0
      %v833 = vsel %vm828, %v802, 0
      %835 = vmatprep.subr.bf16.mxu0 %v776
      %836 = vmatpush1.bf16.msra.mxu0 %v775
      %837 = vmatprep.subr.bf16.mxu0 %v778
      %838 = vmatpush1.bf16.msra.mxu0 %v777
      %839 = vmatprep.subr.bf16.mxu0 %v780
      %840 = vmatpush1.bf16.msra.mxu0 %v779
      %841 = vmatprep.subr.bf16.mxu0 %v782
      %842 = vmatpush1.bf16.msra.mxu0 %v781
      %843 = vmatprep.subr.bf16.mxu0 %v784
      %844 = vmatpush1.bf16.msra.mxu0 %v783
      %845 = vmatprep.subr.bf16.mxu0 %v786
      %846 = vmatpush1.bf16.msra.mxu0 %v785
      %847 = vmatprep.subr.bf16.mxu0 %v788
      %848 = vmatpush1.bf16.msra.mxu0 %v787
      %849 = vmatprep.subr.bf16.mxu0 %v790
      %850 = vmatpush1.bf16.msra.mxu0 %v789
      %851 = vmatprep.subr.bf16.mxu0 %v792
      %852 = vmatpush1.bf16.msra.mxu0 %v791
      %853 = vmatprep.subr.bf16.mxu0 %v794
      %854 = vmatpush1.bf16.msra.mxu0 %v793
      %855 = vmatprep.subr.bf16.mxu0 %v796
      %856 = vmatpush1.bf16.msra.mxu0 %v795
      %857 = vmatprep.subr.bf16.mxu0 %v798
      %858 = vmatpush1.bf16.msra.mxu0 %v797
      %859 = vmatprep.subr.bf16.mxu0 %v800
      %860 = vmatpush1.bf16.msra.mxu0 %v799
      %861 = vmatprep.subr.bf16.mxu0 %v833
      %862 = vmatpush1.bf16.msra.mxu0 %v830
      %863 = vmatprep.subr.bf16.mxu0 0
      %864 = vmatpush1.bf16.msra.mxu0 0
      %865 = vmatprep.subr.bf16.mxu0 0
      %866 = vmatpush1.bf16.msra.mxu0 0
      %867 = vmatprep.mubr.bf16.mxu0 %v826
      %868 = vmatmul.mubr.bf16.gmra.mrb[0].mxu0 %v821
      %v869 = vpop.f32.mrb[0].mxu0
      %v870 = vadd.f32 %v808, %v869
      %v871 = vpop.f32.mrb[0].mxu0
      %v872 = vadd.f32 %v808, %v871
      %v873 = vpop.f32.mrb[0].mxu0
      %v874 = vadd.f32 %v813, %v873
      %v875 = vpop.f32.mrb[0].mxu0
      %v876 = vadd.f32 %v813, %v875
      %877 = vdwg.mxu0
      %v878 = vmax.f32 %v870, 0.0
      %v879 = vmax.f32 %v872, 0.0
      %v880 = vmax.f32 %v874, 0.0
      %v881 = vmax.f32 %v876, 0.0
      %v882 = vpack.c.bf16 %v880, %v878
      %v883 = vpack.c.bf16 %v881, %v879
      %v884 = vld [vmem:[%s3] sm:$0xf]
      %v885 = vld [vmem:[%s3 + $0x4] sm:$0xf]
      %887 = vset.pattern.permute.xlu0 0
      %888 = vperm.xlu0 %887, %v231
      %v889 = vpop.permute.xlu0 %888
      %891 = vset.pattern.permute.xlu0 0
      %892 = vperm.xlu0 %891, %v232
      %v893 = vpop.permute.xlu0 %892
      %v896 = vunpack.c.l.b16 %v884
      %v897 = vunpack.c.l.b16 %v885
      %v898 = vpack.c.b16 %v897, %v896
      %v899 = vrot.slane %v813, 4
      %v900 = vrot.slane %v889, 4
      %v901 = vsel %vm828, %v899, %v900
      %v902 = vrot.slane %v893, 4
      %v903 = vsel %vm828, %v900, %v902
      %vm906 = vcmask 97280
      %v908 = vsel %vm906, %v898, 0
      %vm910 = vcmask 1045504
      %v912 = vsel %vm910, %v882, 0
      %v915 = vsel %vm910, %v883, 0
      %917 = vmatprep.subr.bf16.mxu0 %v915
      %918 = vmatpush1.bf16.msra.mxu0 %v912
      %919 = vmatprep.subr.bf16.mxu0 0
      %920 = vmatpush1.bf16.msra.mxu0 0
      %921 = vmatprep.subr.bf16.mxu0 0
      %922 = vmatpush1.bf16.msra.mxu0 0
      %923 = vmatprep.subr.bf16.mxu0 0
      %924 = vmatpush1.bf16.msra.mxu0 0
      %925 = vmatprep.subr.bf16.mxu0 0
      %926 = vmatpush1.bf16.msra.mxu0 0
      %927 = vmatprep.subr.bf16.mxu0 0
      %928 = vmatpush1.bf16.msra.mxu0 0
      %929 = vmatprep.subr.bf16.mxu0 0
      %930 = vmatpush1.bf16.msra.mxu0 0
      %931 = vmatprep.subr.bf16.mxu0 0
      %932 = vmatpush1.bf16.msra.mxu0 0
      %933 = vmatprep.subr.bf16.mxu0 0
      %934 = vmatpush1.bf16.msra.mxu0 0
      %935 = vmatprep.subr.bf16.mxu0 0
      %936 = vmatpush1.bf16.msra.mxu0 0
      %937 = vmatprep.subr.bf16.mxu0 0
      %938 = vmatpush1.bf16.msra.mxu0 0
      %939 = vmatprep.subr.bf16.mxu0 0
      %940 = vmatpush1.bf16.msra.mxu0 0
      %941 = vmatprep.subr.bf16.mxu0 0
      %942 = vmatpush1.bf16.msra.mxu0 0
      %943 = vmatprep.subr.bf16.mxu0 0
      %944 = vmatpush1.bf16.msra.mxu0 0
      %945 = vmatprep.subr.bf16.mxu0 0
      %946 = vmatpush1.bf16.msra.mxu0 0
      %947 = vmatprep.subr.bf16.mxu0 0
      %948 = vmatpush1.bf16.msra.mxu0 0
      %949 = vmatprep.mubr.bf16.mxu0 0
      %950 = vmatmul.mubr.bf16.gmra.mrb[0].mxu0 %v908
      %v951 = vpop.f32.mrb[0].mxu0
      %v952 = vadd.f32 %v901, %v951
      %v953 = vpop.f32.mrb[0].mxu0
      %v954 = vadd.f32 %v901, %v953
      %v955 = vpop.f32.mrb[0].mxu0
      %v956 = vadd.f32 %v903, %v955
      %v957 = vpop.f32.mrb[0].mxu0
      %v958 = vadd.f32 %v903, %v957
      %959 = vdwg.mxu0
      %v960 = vmax.f32 %v952, 0.0
      %v961 = vmax.f32 %v954, 0.0
      %v962 = vmax.f32 %v956, 0.0
      %v963 = vmax.f32 %v958, 0.0
      %964 = vst [vmem:[%s224] sm:$0xff] %v960
      %965 = vst [vmem:[%s224 + $0x8] sm:$0xff] %v961
      %966 = vst [vmem:[%s224 + $0x10] sm:$0xff] %v962
      %967 = vst [vmem:[%s224 + $0x18] sm:$0xff] %v963
      %p968 = scmp.lt.s32.totalorder %s16, 1
      %s969 = scalar_select %p968, %s16, 1
      %s970 = smul.addr %s969, 4
      %s971 = smul.addr %s970, 8
      %s972 = scalar_lea.vmem %s5, %s971
      // Predicated region
      $region41: #{mrf_forward.1} parent=39 // pred_check
        %p973 = pneg %p144
      $region42: #{mrf_forward.1} parent=39 // pred_check_branch
        %975 = sbr.rel (%p973) target = $region44
      $region43: #{mrf_forward.1} parent=39 // pred_region
        _
      $region44: #{mrf_forward.1} parent=39 // pred_fallthru
        _
    $region40: #{mrf_forward.1} parent=5 // pred_fallthru
      _
    %p976 = scmp.le.s32.totalorder 2, %s11
    // Predicated region
    $region45: #{mrf_forward.1} parent=5 // pred_check
      %p977 = pneg %p976
    $region46: #{mrf_forward.1} parent=5 // pred_check_branch
      %979 = sbr.rel (%p977) target = $region48
    $region47: #{mrf_forward.1} parent=5 // pred_region
      %s980 = ssub.s32 %s11, 2
      // Predicated region
      $region49: #{mrf_forward.1} parent=47 // pred_check
        %p981 = pneg %p150
      $region50: #{mrf_forward.1} parent=47 // pred_check_branch
        %983 = sbr.rel (%p981) target = $region52
      $region51: #{mrf_forward.1} parent=47 // pred_region
        %p984 = scmp.lt.s32.totalorder %s17, 1
        %s985 = scalar_select %p984, %s17, 1
        %s986 = smul.addr %s985, 4
        %s987 = smul.addr %s986, 8
        %s988 = scalar_lea.vmem %s5, %s987
      $region52: #{mrf_forward.1} parent=47 // pred_fallthru
        _
    $region48: #{mrf_forward.1} parent=5 // pred_fallthru
      _
  $region6: #{mrf_forward.1} parent=0 // loop_footer
    %s15 = sadd.s32 1, %s11
  $region7: #{mrf_forward.1} parent=0 // loop_footer_branch
    %10 = sbr.rel target = $region3
  $region8: #{mrf_forward.1} parent=0 // loop_exit
    _

</llo_original>
